<compile_context>
chip_gen: v6e
topology: v6e:2x2x1
jax: 0.10.0
libtpu: 0.0.40
codegen_flags: <defaults>
</compile_context>

<pallas_src>
import jax
import jax.numpy as jnp
from jax.experimental import pallas as pl
from jax.experimental.pallas import tpu as pltpu


# ----------------------------------------------------------------------------
# Single fused kernel: defense -> conv+ReLU -> GAP -> linear head
# One grid step = one block of B images stacked along the lane (W) axis.
# ----------------------------------------------------------------------------
def _fused_forward_kernel(x_ref, tb_ref, sb_ref, c_ref, a_ref,
                          bconv_ref, ghead_ref, ones_ref, bfc_ref,
                          o_ref, dstk_ref):
    """
    x_ref     : (Cin*H, B*W)       bf16 image slab (B images along lanes)
    tb_ref    : (Cin*H, Cin*H)     bf16 blur row operator (1/9 folded in)
    sb_ref    : (B*W, B*W)         bf16 block-diag blur column operator
    c_ref     : (3, B*W, B*W)      bf16 block-diag conv column-shift operators
    a_ref     : (Cout*H, 3*Cin*H)  bf16 concatenated conv left operators
    bconv_ref : (Cout*H, 1)        f32 conv bias (broadcast over lanes)
    ghead_ref : (nclass, Cout*H)   bf16 GAP(1/(H*W)) + linear head folded
    ones_ref  : (B*W, B)           bf16 block-ones per-image reducer
    bfc_ref   : (nclass, 1)        f32 head bias
    o_ref     : (nclass, B)        f32 logits for this block
    dstk_ref  : (3*Cin*H, B*W)     bf16 VMEM scratch for stacked shifted images
    """
    cin_h = x_ref.shape[0]
    x = x_ref[...]                                                    # (Cin*H, B*W)

    # --- defense: separable 3x3 mean blur (zero pad, /9 folded) + clamp -----
    t = jnp.dot(tb_ref[...], x, preferred_element_type=jnp.float32)  # row pass
    blur = jnp.dot(t.astype(jnp.bfloat16), sb_ref[...],
                   preferred_element_type=jnp.float32)                # col pass
    d = jnp.clip(blur, 0.0, 1.0).astype(jnp.bfloat16)                 # (Cin*H, B*W)

    # --- model: Conv3x3(pad=1) + bias + ReLU --------------------------------
    # Shifted copies D_k = d @ C_k stacked along the contraction axis, then a
    # single (Cout*H, 3*Cin*H) @ (3*Cin*H, B*W) MXU pass.
    for k in range(3):                                                # static unroll
        dk = jnp.dot(d, c_ref[k], preferred_element_type=jnp.float32)
        dstk_ref[pl.ds(k * cin_h, cin_h), :] = dk.astype(jnp.bfloat16)
    feat = jnp.dot(a_ref[...], dstk_ref[...],
                   preferred_element_type=jnp.float32)                # (Cout*H, B*W)
    feat = jnp.maximum(feat + bconv_ref[...], 0.0)

    # --- model: global average pool + linear head ---------------------------
    # Lane-dense head matmul, then per-image reduction via block-ones matmul.
    h1 = jnp.dot(ghead_ref[...], feat.astype(jnp.bfloat16),
                 preferred_element_type=jnp.float32)                  # (nclass, B*W)
    logits = jnp.dot(h1.astype(jnp.bfloat16), ones_ref[...],
                     preferred_element_type=jnp.float32)              # (nclass, B)
    o_ref[...] = logits + bfc_ref[...]


# ----------------------------------------------------------------------------
# Host-side (weights-only) operator preparation -- done once, outside the jit
# ----------------------------------------------------------------------------
def _shift_matrix(n, s):
    """M[i, j] = 1 iff j == i + s (in range): (M @ v)[i] = v[i + s], zero-filled."""
    i = jnp.arange(n)[:, None]
    j = jnp.arange(n)[None, :]
    return (j == i + s).astype(jnp.float32)


def prepare_constants(params, *, cin, h, w, b):
    """Precompute all weight-derived operators for a batch block of B images."""
    w_conv = params["w_conv"].astype(jnp.float32)   # (Cout, Cin, 3, 3) PyTorch layout
    b_conv = params["b_conv"].astype(jnp.float32)   # (Cout,)
    w_fc = params["w_fc"].astype(jnp.float32)       # (nclass, Cout)
    b_fc = params["b_fc"].astype(jnp.float32)       # (nclass,)

    row_shift = [_shift_matrix(h, s) for s in (-1, 0, 1)]   # (H, H) left ops
    col_shift = [_shift_matrix(w, -s) for s in (-1, 0, 1)]  # (W, W) right ops
    eye_b = jnp.eye(b, dtype=jnp.float32)

    # Blur: TB @ X @ SB, with the 1/9 scale folded into TB. Column operator is
    # block-diagonal so every image in the lane-stacked block is blurred
    # independently (zero fill at image boundaries == zero padding).
    tb = jnp.kron(jnp.eye(cin, dtype=jnp.float32), sum(row_shift)) * (1.0 / 9.0)
    sb_blk = jnp.kron(eye_b, sum(col_shift))                          # (B*W, B*W)

    # Conv column shifts, block-diag over the B images in a block.
    c_blk = jnp.stack([jnp.kron(eye_b, cs) for cs in col_shift])      # (3, B*W, B*W)

    # Conv left operators grouped by column shift dw, concatenated along the
    # contraction axis: A_all = [A_0 | A_1 | A_2], A_k = sum_dh kron(w[..,dh,k], R_dh)
    a_list = []
    for kw_i in range(3):
        a = None
        for kh_i in range(3):
            blk = jnp.kron(w_conv[:, :, kh_i, kw_i], row_shift[kh_i])
            a = blk if a is None else a + blk
        a_list.append(a)
    a_all = jnp.concatenate(a_list, axis=1)                           # (Cout*H, 3*Cin*H)

    bconv_col = jnp.repeat(b_conv, h)[:, None]                        # (Cout*H, 1)
    ghead = jnp.repeat(w_fc, h, axis=1) * (1.0 / (h * w))             # (nclass, Cout*H)
    ones_blk = jnp.kron(eye_b, jnp.ones((w, 1), jnp.float32))         # (B*W, B)
    bfc_col = b_fc[:, None]                                           # (nclass, 1)

    bf = jnp.bfloat16
    return dict(tb=tb.astype(bf), sb=sb_blk.astype(bf), c=c_blk.astype(bf),
                a=a_all.astype(bf), bconv=bconv_col, ghead=ghead.astype(bf),
                ones=ones_blk.astype(bf), bfc=bfc_col)


# ----------------------------------------------------------------------------
# Block-size selection (per-generation MXU width, v7x 2-TC occupancy)
# ----------------------------------------------------------------------------
def _lane_target():
    """MXU-friendly lane width: 256 on v6e/v7x (2x256x256 MXU), else 128."""
    try:
        kind = jax.devices()[0].device_kind.lower()
    except Exception:
        return 128
    if "v6" in kind or "v7" in kind:
        return 256
    return 128


def _choose_batch_block(n, w, lane_target):
    """Images per grid step, stacked along the lane (W) axis of the slab."""
    b = max(1, min(lane_target // w, n))
    # v7x has 2 TensorCores: keep >= 2 parallel grid steps when the batch
    # allows it, but never shrink a block below 128 lanes (lane density first).
    while b > 1 and -(-n // b) < 2 and (b // 2) * w >= 128:
        b //= 2
    return b


# ----------------------------------------------------------------------------
# ModelWrapper.forward: defense(x) -> model(defended_x), one fused pallas_call
# ----------------------------------------------------------------------------
@jax.jit
def model_wrapper_forward(x, consts):
    n, cin, h, w = x.shape
    cin_h = cin * h
    bw = consts["sb"].shape[0]
    b = bw // w                                  # images per grid step
    cout_h = consts["bconv"].shape[0]
    nclass = consts["ghead"].shape[0]

    g = -(-n // b)                               # number of grid steps
    n_pad = g * b

    # Layout plumbing (one-time): NCHW -> (G, Cin*H, B*W) lane-stacked slabs,
    # cast to bf16 so the input DMA is half-width and the MXU eats bf16.
    xb = x.astype(jnp.bfloat16)
    if n_pad != n:
        xb = jnp.pad(xb, ((0, n_pad - n), (0, 0), (0, 0), (0, 0)))
    slab = (xb.reshape(g, b, cin, h, w)
              .transpose(0, 2, 3, 1, 4)
              .reshape(g, cin_h, b * w))

    out = pl.pallas_call(
        _fused_forward_kernel,
        out_shape=jax.ShapeDtypeStruct((g, nclass, b), jnp.float32),
        grid=(g,),
        in_specs=[
            pl.BlockSpec((None, cin_h, b * w), lambda i: (i, 0, 0)),   # per-block slab
            pl.BlockSpec((cin_h, cin_h), lambda i: (0, 0)),            # resident consts:
            pl.BlockSpec((bw, bw), lambda i: (0, 0)),
            pl.BlockSpec((3, bw, bw), lambda i: (0, 0, 0)),
            pl.BlockSpec((cout_h, 3 * cin_h), lambda i: (0, 0)),
            pl.BlockSpec((cout_h, 1), lambda i: (0, 0)),
            pl.BlockSpec((nclass, cout_h), lambda i: (0, 0)),
            pl.BlockSpec((bw, b), lambda i: (0, 0)),
            pl.BlockSpec((nclass, 1), lambda i: (0, 0)),
        ],
        out_specs=pl.BlockSpec((None, nclass, b), lambda i: (i, 0, 0)),
        scratch_shapes=[pltpu.VMEM((3 * cin_h, b * w), jnp.bfloat16)],
        compiler_params=pltpu.CompilerParams(
            dimension_semantics=("parallel",),    # v7x: blocks split across both TCs
            vmem_limit_bytes=32 * 1024 * 1024,    # explicit; actual footprint << 1 MiB
        ),
    )(slab, consts["tb"], consts["sb"], consts["c"], consts["a"],
      consts["bconv"], consts["ghead"], consts["ones"], consts["bfc"])

    # (G, nclass, B) -> (N, nclass)
    logits = out.transpose(0, 2, 1).reshape(n_pad, nclass)[:n]
    return logits


# ----------------------------------------------------------------------------
# Params + pure-JAX reference (same semantics as the original pipeline)
# ----------------------------------------------------------------------------
def init_params(key, cin=4, cout=8, num_classes=10):
    k1, k2, k3, k4 = jax.random.split(key, 4)
    return {
        "w_conv": 0.1 * jax.random.normal(k1, (cout, cin, 3, 3), jnp.float32),
        "b_conv": 0.01 * jax.random.normal(k2, (cout,), jnp.float32),
        "w_fc": 0.1 * jax.random.normal(k3, (num_classes, cout), jnp.float32),
        "b_fc": 0.01 * jax.random.normal(k4, (num_classes,), jnp.float32),
    }


def reference_forward(x, params):
    n, c, h, w = x.shape
    xp = jnp.pad(x, ((0, 0), (0, 0), (1, 1), (1, 1)))
    acc = 0.0
    for i in range(3):
        for j in range(3):
            acc = acc + xp[:, :, i:i + h, j:j + w]
    d = jnp.clip(acc / 9.0, 0.0, 1.0)

    dp = jnp.pad(d, ((0, 0), (0, 0), (1, 1), (1, 1)))
    w_conv = params["w_conv"]
    feat = 0.0
    for kh in range(3):
        for kw in range(3):
            feat = feat + jnp.einsum("oc,nchw->nohw", w_conv[:, :, kh, kw],
                                     dp[:, :, kh:kh + h, kw:kw + w])
    feat = jnp.maximum(feat + params["b_conv"][None, :, None, None], 0.0)
    pooled = feat.mean(axis=(2, 3))
    return pooled @ params["w_fc"].T + params["b_fc"][None, :]


if __name__ == "__main__":
    key = jax.random.PRNGKey(0)
    kx, kp = jax.random.split(key)

    N, CIN, H, W = 16, 4, 16, 16
    COUT, NCLASS = 8, 10

    # x: (N, C, H, W), values in [0, 1] like image pixels
    x = jax.random.uniform(kx, (N, CIN, H, W), jnp.float32)
    params = init_params(kp, cin=CIN, cout=COUT, num_classes=NCLASS)

    lane_target = _lane_target()
    B = _choose_batch_block(N, W, lane_target)            # 8 images -> 128 lanes here
    consts = prepare_constants(params, cin=CIN, h=H, w=W, b=B)   # weights-only, once

    logits = model_wrapper_forward(x, consts)
    jax.block_until_ready(logits)
    assert logits.shape == (N, NCLASS) and logits.dtype == jnp.float32

    ref = reference_forward(x, params)
    assert jnp.allclose(logits, ref, rtol=2e-2, atol=2e-2), (
        "mismatch vs reference: max abs diff = "
        f"{float(jnp.max(jnp.abs(logits - ref)))}")

    print("KERNEL_OK")
</pallas_src>

<mosaic_0001>
module attributes {stable_mosaic.version = 11 : i64} {
  func.func @_fused_forward_kernel(%arg0: i32, %arg1: memref<1x64x128xbf16, #tpu.memory_space<vmem>>, %arg2: memref<64x64xbf16, #tpu.memory_space<vmem>>, %arg3: memref<128x128xbf16, #tpu.memory_space<vmem>>, %arg4: memref<3x128x128xbf16, #tpu.memory_space<vmem>>, %arg5: memref<128x192xbf16, #tpu.memory_space<vmem>>, %arg6: memref<128x1xf32, #tpu.memory_space<vmem>>, %arg7: memref<10x128xbf16, #tpu.memory_space<vmem>>, %arg8: memref<128x8xbf16, #tpu.memory_space<vmem>>, %arg9: memref<10x1xf32, #tpu.memory_space<vmem>>, %arg10: memref<1x10x8xf32, #tpu.memory_space<vmem>>, %arg11: memref<192x128xbf16, #tpu.memory_space<vmem>>) attributes {dimension_semantics = [#tpu.dimension_semantics<parallel>], iteration_bounds = array<i64: 2>, scalar_prefetch = 0 : i64, scratch_operands = 1 : i64, tpu.core_type = #tpu.core_type<tc>, window_params = [{transform_indices = @transform_0, window_bounds = array<i64: 1, 64, 128>}, {pipeline_mode = #tpu.pipeline_mode<synchronous>, transform_indices = @transform_1, window_bounds = array<i64: 64, 64>}, {pipeline_mode = #tpu.pipeline_mode<synchronous>, transform_indices = @transform_2, window_bounds = array<i64: 128, 128>}, {pipeline_mode = #tpu.pipeline_mode<synchronous>, transform_indices = @transform_3, window_bounds = array<i64: 3, 128, 128>}, {pipeline_mode = #tpu.pipeline_mode<synchronous>, transform_indices = @transform_4, window_bounds = array<i64: 128, 192>}, {pipeline_mode = #tpu.pipeline_mode<synchronous>, transform_indices = @transform_5, window_bounds = array<i64: 128, 1>}, {pipeline_mode = #tpu.pipeline_mode<synchronous>, transform_indices = @transform_6, window_bounds = array<i64: 10, 128>}, {pipeline_mode = #tpu.pipeline_mode<synchronous>, transform_indices = @transform_7, window_bounds = array<i64: 128, 8>}, {pipeline_mode = #tpu.pipeline_mode<synchronous>, transform_indices = @transform_8, window_bounds = array<i64: 10, 1>}, {transform_indices = @transform_9, window_bounds = array<i64: 1, 10, 8>}]} {
    %c0 = arith.constant 0 : index
    %c0_0 = arith.constant 0 : index
    %c0_1 = arith.constant 0 : index
    %0 = vector.load %arg1[%c0, %c0_0, %c0_1] : memref<1x64x128xbf16, #tpu.memory_space<vmem>>, vector<1x64x128xbf16>
    %1 = vector.shape_cast %0 : vector<1x64x128xbf16> to vector<64x128xbf16>
    %c0_2 = arith.constant 0 : index
    %c0_3 = arith.constant 0 : index
    %2 = vector.load %arg2[%c0_2, %c0_3] : memref<64x64xbf16, #tpu.memory_space<vmem>>, vector<64x64xbf16>
    %cst = arith.constant dense<0.000000e+00> : vector<64x128xf32>
    %3 = tpu.matmul %2, %1, %cst {dimension_numbers = #tpu.dot_dimension_numbers<[1], [0], [0], [1], [0, 0, 1, 1], [], []>} : vector<64x64xbf16>, vector<64x128xbf16>, vector<64x128xf32> -> vector<64x128xf32>
    %4 = arith.truncf %3 : vector<64x128xf32> to vector<64x128xbf16>
    %c0_4 = arith.constant 0 : index
    %c0_5 = arith.constant 0 : index
    %5 = vector.load %arg3[%c0_4, %c0_5] : memref<128x128xbf16, #tpu.memory_space<vmem>>, vector<128x128xbf16>
    %cst_6 = arith.constant dense<0.000000e+00> : vector<64x128xf32>
    %6 = tpu.matmul %4, %5, %cst_6 {dimension_numbers = #tpu.dot_dimension_numbers<[1], [0], [0], [1], [0, 0, 1, 1], [], []>} : vector<64x128xbf16>, vector<128x128xbf16>, vector<64x128xf32> -> vector<64x128xf32>
    %cst_7 = arith.constant 0.000000e+00 : f32
    %cst_8 = arith.constant 1.000000e+00 : f32
    %7 = vector.broadcast %cst_7 : f32 to vector<64x128xf32>
    %8 = arith.maximumf %7, %6 : vector<64x128xf32>
    %9 = vector.broadcast %cst_8 : f32 to vector<64x128xf32>
    %10 = arith.minimumf %9, %8 : vector<64x128xf32>
    %11 = arith.truncf %10 : vector<64x128xf32> to vector<64x128xbf16>
    %c0_9 = arith.constant 0 : index
    %c0_10 = arith.constant 0 : index
    %c0_11 = arith.constant 0 : index
    %12 = vector.load %arg4[%c0_9, %c0_10, %c0_11] : memref<3x128x128xbf16, #tpu.memory_space<vmem>>, vector<1x128x128xbf16>
    %13 = vector.shape_cast %12 : vector<1x128x128xbf16> to vector<128x128xbf16>
    %cst_12 = arith.constant dense<0.000000e+00> : vector<64x128xf32>
    %14 = tpu.matmul %11, %13, %cst_12 {dimension_numbers = #tpu.dot_dimension_numbers<[1], [0], [0], [1], [0, 0, 1, 1], [], []>} : vector<64x128xbf16>, vector<128x128xbf16>, vector<64x128xf32> -> vector<64x128xf32>
    %15 = arith.truncf %14 : vector<64x128xf32> to vector<64x128xbf16>
    %c0_13 = arith.constant 0 : index
    %c0_14 = arith.constant 0 : index
    %16 = vector.load %arg11[%c0_13, %c0_14] : memref<192x128xbf16, #tpu.memory_space<vmem>>, vector<64x128xbf16>
    tpu.vector_store %arg11[%c0_13, %c0_14], %15 {strides = array<i32>} : memref<192x128xbf16, #tpu.memory_space<vmem>>, vector<64x128xbf16>,
    %c1 = arith.constant 1 : index
    %c0_15 = arith.constant 0 : index
    %c0_16 = arith.constant 0 : index
    %17 = vector.load %arg4[%c1, %c0_15, %c0_16] : memref<3x128x128xbf16, #tpu.memory_space<vmem>>, vector<1x128x128xbf16>
    %18 = vector.shape_cast %17 : vector<1x128x128xbf16> to vector<128x128xbf16>
    %cst_17 = arith.constant dense<0.000000e+00> : vector<64x128xf32>
    %19 = tpu.matmul %11, %18, %cst_17 {dimension_numbers = #tpu.dot_dimension_numbers<[1], [0], [0], [1], [0, 0, 1, 1], [], []>} : vector<64x128xbf16>, vector<128x128xbf16>, vector<64x128xf32> -> vector<64x128xf32>
    %20 = arith.truncf %19 : vector<64x128xf32> to vector<64x128xbf16>
    %c64 = arith.constant 64 : index
    %c0_18 = arith.constant 0 : index
    %21 = vector.load %arg11[%c64, %c0_18] : memref<192x128xbf16, #tpu.memory_space<vmem>>, vector<64x128xbf16>
    tpu.vector_store %arg11[%c64, %c0_18], %20 {strides = array<i32>} : memref<192x128xbf16, #tpu.memory_space<vmem>>, vector<64x128xbf16>,
    %c2 = arith.constant 2 : index
    %c0_19 = arith.constant 0 : index
    %c0_20 = arith.constant 0 : index
    %22 = vector.load %arg4[%c2, %c0_19, %c0_20] : memref<3x128x128xbf16, #tpu.memory_space<vmem>>, vector<1x128x128xbf16>
    %23 = vector.shape_cast %22 : vector<1x128x128xbf16> to vector<128x128xbf16>
    %cst_21 = arith.constant dense<0.000000e+00> : vector<64x128xf32>
    %24 = tpu.matmul %11, %23, %cst_21 {dimension_numbers = #tpu.dot_dimension_numbers<[1], [0], [0], [1], [0, 0, 1, 1], [], []>} : vector<64x128xbf16>, vector<128x128xbf16>, vector<64x128xf32> -> vector<64x128xf32>
    %25 = arith.truncf %24 : vector<64x128xf32> to vector<64x128xbf16>
    %c128 = arith.constant 128 : index
    %c0_22 = arith.constant 0 : index
    %26 = vector.load %arg11[%c128, %c0_22] : memref<192x128xbf16, #tpu.memory_space<vmem>>, vector<64x128xbf16>
    tpu.vector_store %arg11[%c128, %c0_22], %25 {strides = array<i32>} : memref<192x128xbf16, #tpu.memory_space<vmem>>, vector<64x128xbf16>,
    %c0_23 = arith.constant 0 : index
    %c0_24 = arith.constant 0 : index
    %27 = vector.load %arg5[%c0_23, %c0_24] : memref<128x192xbf16, #tpu.memory_space<vmem>>, vector<128x192xbf16>
    %c0_25 = arith.constant 0 : index
    %c0_26 = arith.constant 0 : index
    %28 = vector.load %arg11[%c0_25, %c0_26] : memref<192x128xbf16, #tpu.memory_space<vmem>>, vector<192x128xbf16>
    %cst_27 = arith.constant dense<0.000000e+00> : vector<128x128xf32>
    %29 = tpu.matmul %27, %28, %cst_27 {dimension_numbers = #tpu.dot_dimension_numbers<[1], [0], [0], [1], [0, 0, 1, 1], [], []>} : vector<128x192xbf16>, vector<192x128xbf16>, vector<128x128xf32> -> vector<128x128xf32>
    %c0_28 = arith.constant 0 : index
    %c0_29 = arith.constant 0 : index
    %30 = vector.load %arg6[%c0_28, %c0_29] : memref<128x1xf32, #tpu.memory_space<vmem>>, vector<128x1xf32>
    %31 = vector.broadcast %30 : vector<128x1xf32> to vector<128x128xf32>
    %32 = arith.addf %29, %31 : vector<128x128xf32>
    %cst_30 = arith.constant 0.000000e+00 : f32
    %33 = vector.broadcast %cst_30 : f32 to vector<128x128xf32>
    %34 = arith.maximumf %32, %33 : vector<128x128xf32>
    %c0_31 = arith.constant 0 : index
    %c0_32 = arith.constant 0 : index
    %35 = vector.load %arg7[%c0_31, %c0_32] : memref<10x128xbf16, #tpu.memory_space<vmem>>, vector<10x128xbf16>
    %36 = arith.truncf %34 : vector<128x128xf32> to vector<128x128xbf16>
    %cst_33 = arith.constant dense<0.000000e+00> : vector<10x128xf32>
    %37 = tpu.matmul %35, %36, %cst_33 {dimension_numbers = #tpu.dot_dimension_numbers<[1], [0], [0], [1], [0, 0, 1, 1], [], []>} : vector<10x128xbf16>, vector<128x128xbf16>, vector<10x128xf32> -> vector<10x128xf32>
    %38 = arith.truncf %37 : vector<10x128xf32> to vector<10x128xbf16>
    %c0_34 = arith.constant 0 : index
    %c0_35 = arith.constant 0 : index
    %39 = vector.load %arg8[%c0_34, %c0_35] : memref<128x8xbf16, #tpu.memory_space<vmem>>, vector<128x8xbf16>
    %cst_36 = arith.constant dense<0.000000e+00> : vector<10x8xf32>
    %40 = tpu.matmul %38, %39, %cst_36 {dimension_numbers = #tpu.dot_dimension_numbers<[1], [0], [0], [1], [0, 0, 1, 1], [], []>} : vector<10x128xbf16>, vector<128x8xbf16>, vector<10x8xf32> -> vector<10x8xf32>
    %c0_37 = arith.constant 0 : index
    %c0_38 = arith.constant 0 : index
    %41 = vector.load %arg9[%c0_37, %c0_38] : memref<10x1xf32, #tpu.memory_space<vmem>>, vector<10x1xf32>
    %42 = vector.broadcast %41 : vector<10x1xf32> to vector<10x8xf32>
    %43 = arith.addf %40, %42 : vector<10x8xf32>
    %c0_39 = arith.constant 0 : index
    %c0_40 = arith.constant 0 : index
    %c0_41 = arith.constant 0 : index
    %44 = vector.load %arg10[%c0_39, %c0_40, %c0_41] : memref<1x10x8xf32, #tpu.memory_space<vmem>>, vector<1x10x8xf32>
    %45 = vector.shape_cast %44 : vector<1x10x8xf32> to vector<10x8xf32>
    %46 = vector.shape_cast %43 : vector<10x8xf32> to vector<1x10x8xf32>
    tpu.vector_store %arg10[%c0_39, %c0_40, %c0_41], %46 {strides = array<i32>} : memref<1x10x8xf32, #tpu.memory_space<vmem>>, vector<1x10x8xf32>,
    return
  }
  func.func @transform_0(%arg0: i32) -> (i32, i32, i32) {
    %c0_i32 = arith.constant 0 : i32
    %c0_i32_0 = arith.constant 0 : i32
    %c0_i32_1 = arith.constant 0 : i32
    return %arg0, %c0_i32, %c0_i32_0 : i32, i32, i32
  }
  func.func @transform_1(%arg0: i32) -> (i32, i32) {
    %c0_i32 = arith.constant 0 : i32
    %c0_i32_0 = arith.constant 0 : i32
    %c0_i32_1 = arith.constant 0 : i32
    return %c0_i32, %c0_i32_0 : i32, i32
  }
  func.func @transform_2(%arg0: i32) -> (i32, i32) {
    %c0_i32 = arith.constant 0 : i32
    %c0_i32_0 = arith.constant 0 : i32
    %c0_i32_1 = arith.constant 0 : i32
    return %c0_i32, %c0_i32_0 : i32, i32
  }
  func.func @transform_3(%arg0: i32) -> (i32, i32, i32) {
    %c0_i32 = arith.constant 0 : i32
    %c0_i32_0 = arith.constant 0 : i32
    %c0_i32_1 = arith.constant 0 : i32
    %c0_i32_2 = arith.constant 0 : i32
    return %c0_i32, %c0_i32_0, %c0_i32_1 : i32, i32, i32
  }
  func.func @transform_4(%arg0: i32) -> (i32, i32) {
    %c0_i32 = arith.constant 0 : i32
    %c0_i32_0 = arith.constant 0 : i32
    %c0_i32_1 = arith.constant 0 : i32
    return %c0_i32, %c0_i32_0 : i32, i32
  }
  func.func @transform_5(%arg0: i32) -> (i32, i32) {
    %c0_i32 = arith.constant 0 : i32
    %c0_i32_0 = arith.constant 0 : i32
    %c0_i32_1 = arith.constant 0 : i32
    return %c0_i32, %c0_i32_0 : i32, i32
  }
  func.func @transform_6(%arg0: i32) -> (i32, i32) {
    %c0_i32 = arith.constant 0 : i32
    %c0_i32_0 = arith.constant 0 : i32
    %c0_i32_1 = arith.constant 0 : i32
    return %c0_i32, %c0_i32_0 : i32, i32
  }
  func.func @transform_7(%arg0: i32) -> (i32, i32) {
    %c0_i32 = arith.constant 0 : i32
    %c0_i32_0 = arith.constant 0 : i32
    %c0_i32_1 = arith.constant 0 : i32
    return %c0_i32, %c0_i32_0 : i32, i32
  }
  func.func @transform_8(%arg0: i32) -> (i32, i32) {
    %c0_i32 = arith.constant 0 : i32
    %c0_i32_0 = arith.constant 0 : i32
    %c0_i32_1 = arith.constant 0 : i32
    return %c0_i32, %c0_i32_0 : i32, i32
  }
  func.func @transform_9(%arg0: i32) -> (i32, i32, i32) {
    %c0_i32 = arith.constant 0 : i32
    %c0_i32_0 = arith.constant 0 : i32
    %c0_i32_1 = arith.constant 0 : i32
    return %arg0, %c0_i32, %c0_i32_0 : i32, i32, i32
  }
}

</mosaic_0001>

<llo_original>
// kernel: model_wrapper_forward.1
$region0: #{model_wrapper_forward.1}
  #allocation0 [shape = 'u32[]', space=smem, size = 0x4, offset = 0x4, fixed_abs, tag = 'smem constant byte address 0x4 - core index']
  #allocation1 [shape = 'u32[144,128]{1,0:T(1,128)}', space=vmem, size = 0x12000, scoped, tag = 'internal scratch']
  #allocation2 [shape = 'bf16[192,128]{1,0:T(8,128)(2,1)}', space=vmem, size = 0xc000, scoped, tag = 'scratch operand']
  %s0 = inlined_call_operand.vmem [shape: bf16[2,64,128], index: 0, kind: input, shape index: {}]
  %s1 = inlined_call_operand.vmem [shape: bf16[64,64], index: 1, kind: input, shape index: {}]
  %s2 = inlined_call_operand.vmem [shape: bf16[128,128], index: 2, kind: input, shape index: {}]
  %s3 = inlined_call_operand.vmem [shape: bf16[3,128,128], index: 3, kind: input, shape index: {}]
  %s4 = inlined_call_operand.vmem [shape: bf16[128,192], index: 4, kind: input, shape index: {}]
  %s5 = inlined_call_operand.vmem [shape: f32[128,1], index: 5, kind: input, shape index: {}]
  %s6 = inlined_call_operand.vmem [shape: bf16[10,128], index: 6, kind: input, shape index: {}]
  %s7 = inlined_call_operand.vmem [shape: bf16[128,8], index: 7, kind: input, shape index: {}]
  %s8 = inlined_call_operand.vmem [shape: f32[10,1], index: 8, kind: input, shape index: {}]
  %s9 = inlined_call_operand.vmem [shape: f32[2,10,8], index: 9, kind: output, shape index: {}]
  %s10 = sld [smem:[#allocation0]]
  $region69: #{model_wrapper_forward.1} parent=0
    _
  %s12 = ssub.s32 1, %s10
  %s13 = scalar_select 0, %s12, %s10
  loop: start=0, step=1, limit=4
  $region2: #{model_wrapper_forward.1} parent=0 // loop_pre_header
    _
  $region3: #{model_wrapper_forward.1} parent=0 // loop_header
    %s15 = sphi 0, %s19
    %p16 = scmp.ge.s32.totalorder %s15, 4
    %s25 = sphi 0, %s27
    %s28 = sphi 0, %s25
    %s29 = sphi 0, %s28
    %s45 = sphi 0, %s29
    %s49 = sphi 0, %s49
    %s51 = sphi 0, %s49
    %s52 = sphi 0, %s51
    %s66 = sphi 0, %s52
    %s70 = sphi 0, %s70
    %s72 = sphi 0, %s70
    %s73 = sphi 0, %s72
    %s87 = sphi 0, %s73
    %s91 = sphi 0, %s91
    %s93 = sphi 0, %s91
    %s94 = sphi 0, %s93
    %s108 = sphi 0, %s94
    %s112 = sphi 0, %s112
    %s114 = sphi 0, %s112
    %s115 = sphi 0, %s114
    %s129 = sphi 0, %s115
    %s133 = sphi 0, %s133
    %s135 = sphi 0, %s133
    %s136 = sphi 0, %s135
    %s150 = sphi 0, %s136
    %s154 = sphi 0, %s154
    %s156 = sphi 0, %s154
    %s157 = sphi 0, %s156
    %s171 = sphi 0, %s157
    %s175 = sphi 0, %s175
    %s177 = sphi 0, %s175
    %s178 = sphi 0, %s177
    %s192 = sphi 0, %s178
    %s196 = sphi 0, %s196
    %s198 = sphi 0, %s196
    %s199 = sphi 0, %s198
    %s213 = sphi 0, %s199
    %s219 = sphi 0, %s221
    %s222 = sphi 0, %s219
    %s223 = sphi 0, %s222
    %s239 = sphi 0, %s223
  $region4: #{model_wrapper_forward.1} parent=0 // loop_header_branch
    %18 = sbr.rel (%p16) target = $region8
  $region5: #{model_wrapper_forward.1} parent=0 // loop_body
    %s20 = ssub.s32 %s15, 1
    %s21 = ssub.s32 %s15, 2
    %s22 = sadd.s32 %s15, 1
    %s23 = ssub.s32 %s15, %s22
    %p24 = scmp.eq.s32.totalorder %s23, 0
    %s26 = sadd.s32 %s25, 1
    %s27 = scalar_select %p24, %s25, %s26
    %p30 = pneg %p24
    %p31 = scmp.eq.s32.totalorder %s15, 1
    %p32 = por %p30, %p31
    %p33 = scmp.ne.s32.totalorder %s25, %s28
    %p34 = scmp.eq.s32.totalorder %s15, 0
    %p35 = por %p33, %p34
    %p36 = scmp.ne.s32.totalorder %s25, %s28
    %p37 = scmp.eq.s32.totalorder %s20, 1
    %p38 = por %p36, %p37
    %p39 = scmp.ne.s32.totalorder %s28, %s29
    %p40 = scmp.eq.s32.totalorder %s20, 0
    %p41 = por %p39, %p40
    %p42 = scmp.ne.s32.totalorder %s28, %s29
    %p43 = scmp.eq.s32.totalorder %s21, 1
    %p44 = por %p42, %p43
    %p46 = scmp.ne.s32.totalorder %s29, %s45
    %p47 = scmp.eq.s32.totalorder %s21, 0
    %p48 = por %p46, %p47
    %s50 = sadd.s32 %s49, 1
    %p53 = scmp.eq.s32.totalorder %s15, 1
    %p54 = scmp.ne.s32.totalorder %s49, %s51
    %p55 = scmp.eq.s32.totalorder %s15, 0
    %p56 = por %p54, %p55
    %p57 = scmp.ne.s32.totalorder %s49, %s51
    %p58 = scmp.eq.s32.totalorder %s20, 1
    %p59 = por %p57, %p58
    %p60 = scmp.ne.s32.totalorder %s51, %s52
    %p61 = scmp.eq.s32.totalorder %s20, 0
    %p62 = por %p60, %p61
    %p63 = scmp.ne.s32.totalorder %s51, %s52
    %p64 = scmp.eq.s32.totalorder %s21, 1
    %p65 = por %p63, %p64
    %p67 = scmp.ne.s32.totalorder %s52, %s66
    %p68 = scmp.eq.s32.totalorder %s21, 0
    %p69 = por %p67, %p68
    %s71 = sadd.s32 %s70, 1
    %p74 = scmp.eq.s32.totalorder %s15, 1
    %p75 = scmp.ne.s32.totalorder %s70, %s72
    %p76 = scmp.eq.s32.totalorder %s15, 0
    %p77 = por %p75, %p76
    %p78 = scmp.ne.s32.totalorder %s70, %s72
    %p79 = scmp.eq.s32.totalorder %s20, 1
    %p80 = por %p78, %p79
    %p81 = scmp.ne.s32.totalorder %s72, %s73
    %p82 = scmp.eq.s32.totalorder %s20, 0
    %p83 = por %p81, %p82
    %p84 = scmp.ne.s32.totalorder %s72, %s73
    %p85 = scmp.eq.s32.totalorder %s21, 1
    %p86 = por %p84, %p85
    %p88 = scmp.ne.s32.totalorder %s73, %s87
    %p89 = scmp.eq.s32.totalorder %s21, 0
    %p90 = por %p88, %p89
    %s92 = sadd.s32 %s91, 1
    %p95 = scmp.eq.s32.totalorder %s15, 1
    %p96 = scmp.ne.s32.totalorder %s91, %s93
    %p97 = scmp.eq.s32.totalorder %s15, 0
    %p98 = por %p96, %p97
    %p99 = scmp.ne.s32.totalorder %s91, %s93
    %p100 = scmp.eq.s32.totalorder %s20, 1
    %p101 = por %p99, %p100
    %p102 = scmp.ne.s32.totalorder %s93, %s94
    %p103 = scmp.eq.s32.totalorder %s20, 0
    %p104 = por %p102, %p103
    %p105 = scmp.ne.s32.totalorder %s93, %s94
    %p106 = scmp.eq.s32.totalorder %s21, 1
    %p107 = por %p105, %p106
    %p109 = scmp.ne.s32.totalorder %s94, %s108
    %p110 = scmp.eq.s32.totalorder %s21, 0
    %p111 = por %p109, %p110
    %s113 = sadd.s32 %s112, 1
    %p116 = scmp.eq.s32.totalorder %s15, 1
    %p117 = scmp.ne.s32.totalorder %s112, %s114
    %p118 = scmp.eq.s32.totalorder %s15, 0
    %p119 = por %p117, %p118
    %p120 = scmp.ne.s32.totalorder %s112, %s114
    %p121 = scmp.eq.s32.totalorder %s20, 1
    %p122 = por %p120, %p121
    %p123 = scmp.ne.s32.totalorder %s114, %s115
    %p124 = scmp.eq.s32.totalorder %s20, 0
    %p125 = por %p123, %p124
    %p126 = scmp.ne.s32.totalorder %s114, %s115
    %p127 = scmp.eq.s32.totalorder %s21, 1
    %p128 = por %p126, %p127
    %p130 = scmp.ne.s32.totalorder %s115, %s129
    %p131 = scmp.eq.s32.totalorder %s21, 0
    %p132 = por %p130, %p131
    %s134 = sadd.s32 %s133, 1
    %p137 = scmp.eq.s32.totalorder %s15, 1
    %p138 = scmp.ne.s32.totalorder %s133, %s135
    %p139 = scmp.eq.s32.totalorder %s15, 0
    %p140 = por %p138, %p139
    %p141 = scmp.ne.s32.totalorder %s133, %s135
    %p142 = scmp.eq.s32.totalorder %s20, 1
    %p143 = por %p141, %p142
    %p144 = scmp.ne.s32.totalorder %s135, %s136
    %p145 = scmp.eq.s32.totalorder %s20, 0
    %p146 = por %p144, %p145
    %p147 = scmp.ne.s32.totalorder %s135, %s136
    %p148 = scmp.eq.s32.totalorder %s21, 1
    %p149 = por %p147, %p148
    %p151 = scmp.ne.s32.totalorder %s136, %s150
    %p152 = scmp.eq.s32.totalorder %s21, 0
    %p153 = por %p151, %p152
    %s155 = sadd.s32 %s154, 1
    %p158 = scmp.eq.s32.totalorder %s15, 1
    %p159 = scmp.ne.s32.totalorder %s154, %s156
    %p160 = scmp.eq.s32.totalorder %s15, 0
    %p161 = por %p159, %p160
    %p162 = scmp.ne.s32.totalorder %s154, %s156
    %p163 = scmp.eq.s32.totalorder %s20, 1
    %p164 = por %p162, %p163
    %p165 = scmp.ne.s32.totalorder %s156, %s157
    %p166 = scmp.eq.s32.totalorder %s20, 0
    %p167 = por %p165, %p166
    %p168 = scmp.ne.s32.totalorder %s156, %s157
    %p169 = scmp.eq.s32.totalorder %s21, 1
    %p170 = por %p168, %p169
    %p172 = scmp.ne.s32.totalorder %s157, %s171
    %p173 = scmp.eq.s32.totalorder %s21, 0
    %p174 = por %p172, %p173
    %s176 = sadd.s32 %s175, 1
    %p179 = scmp.eq.s32.totalorder %s15, 1
    %p180 = scmp.ne.s32.totalorder %s175, %s177
    %p181 = scmp.eq.s32.totalorder %s15, 0
    %p182 = por %p180, %p181
    %p183 = scmp.ne.s32.totalorder %s175, %s177
    %p184 = scmp.eq.s32.totalorder %s20, 1
    %p185 = por %p183, %p184
    %p186 = scmp.ne.s32.totalorder %s177, %s178
    %p187 = scmp.eq.s32.totalorder %s20, 0
    %p188 = por %p186, %p187
    %p189 = scmp.ne.s32.totalorder %s177, %s178
    %p190 = scmp.eq.s32.totalorder %s21, 1
    %p191 = por %p189, %p190
    %p193 = scmp.ne.s32.totalorder %s178, %s192
    %p194 = scmp.eq.s32.totalorder %s21, 0
    %p195 = por %p193, %p194
    %s197 = sadd.s32 %s196, 1
    %p200 = scmp.eq.s32.totalorder %s15, 1
    %p201 = scmp.ne.s32.totalorder %s196, %s198
    %p202 = scmp.eq.s32.totalorder %s15, 0
    %p203 = por %p201, %p202
    %p204 = scmp.ne.s32.totalorder %s196, %s198
    %p205 = scmp.eq.s32.totalorder %s20, 1
    %p206 = por %p204, %p205
    %p207 = scmp.ne.s32.totalorder %s198, %s199
    %p208 = scmp.eq.s32.totalorder %s20, 0
    %p209 = por %p207, %p208
    %p210 = scmp.ne.s32.totalorder %s198, %s199
    %p211 = scmp.eq.s32.totalorder %s21, 1
    %p212 = por %p210, %p211
    %p214 = scmp.ne.s32.totalorder %s199, %s213
    %p215 = scmp.eq.s32.totalorder %s21, 0
    %p216 = por %p214, %p215
    %s217 = ssub.s32 %s15, %s22
    %p218 = scmp.eq.s32.totalorder %s217, 0
    %s220 = sadd.s32 %s219, 1
    %s221 = scalar_select %p218, %s219, %s220
    %p224 = pneg %p218
    %p225 = scmp.eq.s32.totalorder %s15, 1
    %p226 = por %p224, %p225
    %p227 = scmp.ne.s32.totalorder %s219, %s222
    %p228 = scmp.eq.s32.totalorder %s15, 0
    %p229 = por %p227, %p228
    %p230 = scmp.ne.s32.totalorder %s219, %s222
    %p231 = scmp.eq.s32.totalorder %s20, 1
    %p232 = por %p230, %p231
    %p233 = scmp.ne.s32.totalorder %s222, %s223
    %p234 = scmp.eq.s32.totalorder %s20, 0
    %p235 = por %p233, %p234
    %p236 = scmp.ne.s32.totalorder %s222, %s223
    %p237 = scmp.eq.s32.totalorder %s21, 1
    %p238 = por %p236, %p237
    %p240 = scmp.ne.s32.totalorder %s223, %s239
    %p241 = scmp.eq.s32.totalorder %s21, 0
    %p242 = por %p240, %p241
    %p243 = scmp.le.s32.totalorder 1, %s15
    %p244 = scmp.lt.s32.totalorder %s15, 3
    %p245 = pnand %p243, %p244
    %p246 = pneg %p245
    // Predicated region
    $region9: #{model_wrapper_forward.1} parent=5 // pred_check
      _
    $region10: #{model_wrapper_forward.1} parent=5 // pred_check_branch
      %248 = sbr.rel (%p245) target = $region12
    $region11: #{model_wrapper_forward.1} parent=5 // pred_region
      %s249 = ssub.s32 %s15, 1
      // Predicated region
      $region13: #{model_wrapper_forward.1} parent=11 // pred_check
        %p250 = pneg %p62
      $region14: #{model_wrapper_forward.1} parent=11 // pred_check_branch
        %252 = sbr.rel (%p250) target = $region16
      $region15: #{model_wrapper_forward.1} parent=11 // pred_region
        _
      $region16: #{model_wrapper_forward.1} parent=11 // pred_fallthru
        _
      // Predicated region
      $region17: #{model_wrapper_forward.1} parent=11 // pred_check
        %p253 = pneg %p83
      $region18: #{model_wrapper_forward.1} parent=11 // pred_check_branch
        %255 = sbr.rel (%p253) target = $region20
      $region19: #{model_wrapper_forward.1} parent=11 // pred_region
        _
      $region20: #{model_wrapper_forward.1} parent=11 // pred_fallthru
        _
      // Predicated region
      $region21: #{model_wrapper_forward.1} parent=11 // pred_check
        %p256 = pneg %p104
      $region22: #{model_wrapper_forward.1} parent=11 // pred_check_branch
        %258 = sbr.rel (%p256) target = $region24
      $region23: #{model_wrapper_forward.1} parent=11 // pred_region
        _
      $region24: #{model_wrapper_forward.1} parent=11 // pred_fallthru
        _
      // Predicated region
      $region25: #{model_wrapper_forward.1} parent=11 // pred_check
        %p259 = pneg %p125
      $region26: #{model_wrapper_forward.1} parent=11 // pred_check_branch
        %261 = sbr.rel (%p259) target = $region28
      $region27: #{model_wrapper_forward.1} parent=11 // pred_region
        _
      $region28: #{model_wrapper_forward.1} parent=11 // pred_fallthru
        _
      // Predicated region
      $region29: #{model_wrapper_forward.1} parent=11 // pred_check
        %p262 = pneg %p146
      $region30: #{model_wrapper_forward.1} parent=11 // pred_check_branch
        %264 = sbr.rel (%p262) target = $region32
      $region31: #{model_wrapper_forward.1} parent=11 // pred_region
        _
      $region32: #{model_wrapper_forward.1} parent=11 // pred_fallthru
        _
      // Predicated region
      $region33: #{model_wrapper_forward.1} parent=11 // pred_check
        %p265 = pneg %p167
      $region34: #{model_wrapper_forward.1} parent=11 // pred_check_branch
        %267 = sbr.rel (%p265) target = $region36
      $region35: #{model_wrapper_forward.1} parent=11 // pred_region
        _
      $region36: #{model_wrapper_forward.1} parent=11 // pred_fallthru
        _
      // Predicated region
      $region37: #{model_wrapper_forward.1} parent=11 // pred_check
        %p268 = pneg %p188
      $region38: #{model_wrapper_forward.1} parent=11 // pred_check_branch
        %270 = sbr.rel (%p268) target = $region40
      $region39: #{model_wrapper_forward.1} parent=11 // pred_region
        _
      $region40: #{model_wrapper_forward.1} parent=11 // pred_fallthru
        _
      // Predicated region
      $region41: #{model_wrapper_forward.1} parent=11 // pred_check
        %p271 = pneg %p209
      $region42: #{model_wrapper_forward.1} parent=11 // pred_check_branch
        %273 = sbr.rel (%p271) target = $region44
      $region43: #{model_wrapper_forward.1} parent=11 // pred_region
        _
      $region44: #{model_wrapper_forward.1} parent=11 // pred_fallthru
        _
    $region12: #{model_wrapper_forward.1} parent=5 // pred_fallthru
      _
    %p274 = scmp.lt.s32.totalorder %s15, 2
    // Predicated region
    $region45: #{model_wrapper_forward.1} parent=5 // pred_check
      %p275 = pneg %p274
    $region46: #{model_wrapper_forward.1} parent=5 // pred_check_branch
      %277 = sbr.rel (%p275) target = $region48
    $region47: #{model_wrapper_forward.1} parent=5 // pred_region
      // Predicated region
      $region49: #{model_wrapper_forward.1} parent=47 // pred_check
        %p278 = pneg %p35
      $region50: #{model_wrapper_forward.1} parent=47 // pred_check_branch
        %280 = sbr.rel (%p278) target = $region52
      $region51: #{model_wrapper_forward.1} parent=47 // pred_region
        %p281 = scmp.lt.s32.totalorder %s15, 1
        %s282 = scalar_select %p281, %s15, 1
        %s283 = smul.addr %s282, 8
        %s284 = smul.addr %s283, 4
        %s285 = scalar_lea.vmem %s0, %s284
      $region52: #{model_wrapper_forward.1} parent=47 // pred_fallthru
        _
    $region48: #{model_wrapper_forward.1} parent=5 // pred_fallthru
      _
    %p286 = scmp.le.s32.totalorder 1, %s15
    %p287 = scmp.lt.s32.totalorder %s15, 3
    %p288 = pnand %p286, %p287
    %p289 = pneg %p288
    // Predicated region
    $region53: #{model_wrapper_forward.1} parent=5 // pred_check
      _
    $region54: #{model_wrapper_forward.1} parent=5 // pred_check_branch
      %291 = sbr.rel (%p288) target = $region56
    $region55: #{model_wrapper_forward.1} parent=5 // pred_region
      %s292 = ssub.s32 %s15, 1
      %p293 = scmp.lt.s32.totalorder %s20, 1
      %s294 = scalar_select %p293, %s20, 1
      %s295 = smul.addr %s294, 8
      %s296 = smul.addr %s295, 4
      %s297 = scalar_lea.vmem %s0, %s296
      %p298 = pneg %p41
      %p299 = pneg %p38
      %p300 = pneg %p62
      %p301 = pneg %p59
      %p302 = pneg %p83
      %p303 = pneg %p80
      %p304 = pneg %p104
      %p305 = pneg %p101
      %p306 = pneg %p125
      %p307 = pneg %p122
      %p308 = pneg %p146
      %p309 = pneg %p143
      %p310 = pneg %p167
      %p311 = pneg %p164
      %p312 = pneg %p188
      %p313 = pneg %p185
      %p314 = pneg %p209
      %p315 = pneg %p206
      %p316 = pneg %p235
      %p317 = pneg %p232
      %p318 = scmp.lt.s32.totalorder %s20, 1
      %s319 = scalar_select %p318, %s20, 1
      %s320 = smul.addr %s319, 2
      %s321 = smul.addr %s320, 8
      %s322 = scalar_lea.vmem %s9, %s321
      %p323 = scmp.lt.s32.totalorder %s20, 1
      %s324 = scalar_select %p323, %s20, 1
      %s325 = smul.addr %s324, 8
      %s326 = smul.addr %s325, 4
      %s327 = scalar_lea.vmem %s0, %s326
      %p328 = scmp.lt.s32.totalorder %s20, 1
      %s329 = scalar_select %p328, %s20, 1
      %s330 = smul.addr %s329, 2
      %s331 = smul.addr %s330, 8
      %s332 = scalar_lea.vmem %s9, %s331
      %v334 = vld [vmem:[%s327] sm:$0xf]
      %v335 = vld [vmem:[%s327 + $0x4] sm:$0xf]
      %v336 = vld [vmem:[%s327 + $0x8] sm:$0xf]
      %v337 = vld [vmem:[%s327 + $0xc] sm:$0xf]
      %v338 = vld [vmem:[%s327 + $0x10] sm:$0xf]
      %v339 = vld [vmem:[%s327 + $0x14] sm:$0xf]
      %v340 = vld [vmem:[%s327 + $0x18] sm:$0xf]
      %v341 = vld [vmem:[%s327 + $0x1c] sm:$0xf]
      %v342 = vld [vmem:[%s1] sm:$0xf]
      %v343 = vld [vmem:[%s1 + $0x4] sm:$0xf]
      %v344 = vld [vmem:[%s1 + $0x8] sm:$0xf]
      %v345 = vld [vmem:[%s1 + $0xc] sm:$0xf]
      %v346 = vld [vmem:[%s1 + $0x10] sm:$0xf]
      %v347 = vld [vmem:[%s1 + $0x14] sm:$0xf]
      %v348 = vld [vmem:[%s1 + $0x18] sm:$0xf]
      %v349 = vld [vmem:[%s1 + $0x1c] sm:$0xf]
      %v358 = vunpack.c.l.b16 %v342
      %v359 = vunpack.c.l.b16 %v343
      %v360 = vunpack.c.l.b16 %v344
      %v361 = vunpack.c.l.b16 %v345
      %v362 = vunpack.c.l.b16 %v346
      %v363 = vunpack.c.l.b16 %v347
      %v364 = vunpack.c.l.b16 %v348
      %v365 = vunpack.c.l.b16 %v349
      %v366 = vpack.c.b16 %v359, %v358
      %v367 = vpack.c.b16 %v361, %v360
      %v368 = vpack.c.b16 %v363, %v362
      %v369 = vpack.c.b16 %v365, %v364
      %v378 = vunpack.c.l.b16 %v334
      %v379 = vunpack.c.l.b16 %v335
      %v380 = vunpack.c.l.b16 %v336
      %v381 = vunpack.c.l.b16 %v337
      %v382 = vunpack.c.l.b16 %v338
      %v383 = vunpack.c.l.b16 %v339
      %v384 = vunpack.c.l.b16 %v340
      %v385 = vunpack.c.l.b16 %v341
      %v386 = vpack.c.b16 %v379, %v378
      %v387 = vpack.c.b16 %v381, %v380
      %v388 = vpack.c.b16 %v383, %v382
      %v389 = vpack.c.b16 %v385, %v384
      %vm394 = vcmask 523264
      %v396 = vsel %vm394, %v366, 0
      %v399 = vsel %vm394, %v367, 0
      %v402 = vsel %vm394, %v368, 0
      %v405 = vsel %vm394, %v369, 0
      %407 = vmatprep.subr.bf16.mxu0 0
      %408 = vmatpush1.bf16.msra.mxu0 0
      %409 = vmatprep.subr.bf16.mxu0 0
      %410 = vmatpush1.bf16.msra.mxu0 0
      %411 = vmatprep.subr.bf16.mxu0 0
      %412 = vmatpush1.bf16.msra.mxu0 0
      %413 = vmatprep.subr.bf16.mxu0 0
      %414 = vmatpush1.bf16.msra.mxu0 0
      %415 = vmatprep.subr.bf16.mxu0 0
      %416 = vmatpush1.bf16.msra.mxu0 %v389
      %417 = vmatprep.subr.bf16.mxu0 0
      %418 = vmatpush1.bf16.msra.mxu0 %v388
      %419 = vmatprep.subr.bf16.mxu0 0
      %420 = vmatpush1.bf16.msra.mxu0 %v387
      %421 = vmatprep.subr.bf16.mxu0 0
      %422 = vmatpush1.bf16.msra.mxu0 %v386
      %423 = vmatprep.subr.bf16.mxu0 0
      %424 = vmatpush2.bf16.msra.mxu0 0
      %425 = vmatprep.subr.bf16.mxu0 0
      %426 = vmatpush2.bf16.msra.mxu0 0
      %427 = vmatprep.subr.bf16.mxu0 0
      %428 = vmatpush2.bf16.msra.mxu0 0
      %429 = vmatprep.subr.bf16.mxu0 0
      %430 = vmatpush2.bf16.msra.mxu0 0
      %431 = vmatprep.subr.bf16.mxu0 0
      %432 = vmatpush2.bf16.msra.mxu0 0
      %433 = vmatprep.subr.bf16.mxu0 0
      %434 = vmatpush2.bf16.msra.mxu0 0
      %435 = vmatprep.subr.bf16.mxu0 0
      %436 = vmatpush2.bf16.msra.mxu0 0
      %437 = vmatprep.subr.bf16.mxu0 0
      %438 = vmatpush2.bf16.msra.mxu0 0
      %439 = vmatprep.mubr.bf16.mxu0 0
      %440 = vmatmul.mubr.bf16.gmra.mxu0 %v396
      %v441 = vpop.f32.mrf.mxu0
      %v442 = vadd.f32 0.0, %v441
      %v443 = vpop.f32.mrf.mxu0
      %v444 = vpop.f32.mrf.mxu0
      %v445 = vadd.f32 0.0, %v444
      %v446 = vpop.f32.mrf.mxu0
      %447 = vmatprep.mubr.bf16.mxu0 0
      %448 = vmatmul.mubr.bf16.gmra.mxu0 %v399
      %v449 = vpop.f32.mrf.mxu0
      %v450 = vadd.f32 0.0, %v449
      %v451 = vpop.f32.mrf.mxu0
      %v452 = vpop.f32.mrf.mxu0
      %v453 = vadd.f32 0.0, %v452
      %v454 = vpop.f32.mrf.mxu0
      %455 = vmatprep.mubr.bf16.mxu0 0
      %456 = vmatmul.mubr.bf16.gmra.mxu0 %v402
      %v457 = vpop.f32.mrf.mxu0
      %v458 = vadd.f32 0.0, %v457
      %v459 = vpop.f32.mrf.mxu0
      %v460 = vpop.f32.mrf.mxu0
      %v461 = vadd.f32 0.0, %v460
      %v462 = vpop.f32.mrf.mxu0
      %463 = vmatprep.mubr.bf16.mxu0 0
      %464 = vmatmul.mubr.bf16.gmra.mxu0 %v405
      %v465 = vpop.f32.mrf.mxu0
      %v466 = vadd.f32 0.0, %v465
      %v467 = vpop.f32.mrf.mxu0
      %v468 = vpop.f32.mrf.mxu0
      %v469 = vadd.f32 0.0, %v468
      %v470 = vpop.f32.mrf.mxu0
      %471 = vdwg.mxu0
      %v472 = vpack.c.bf16 %v445, %v442
      %v473 = vpack.c.bf16 %v453, %v450
      %v474 = vpack.c.bf16 %v461, %v458
      %v475 = vpack.c.bf16 %v469, %v466
      %v476 = vld [vmem:[%s2] sm:$0xf]
      %v477 = vld [vmem:[%s2 + $0x4] sm:$0xf]
      %v478 = vld [vmem:[%s2 + $0x8] sm:$0xf]
      %v479 = vld [vmem:[%s2 + $0xc] sm:$0xf]
      %v480 = vld [vmem:[%s2 + $0x10] sm:$0xf]
      %v481 = vld [vmem:[%s2 + $0x14] sm:$0xf]
      %v482 = vld [vmem:[%s2 + $0x18] sm:$0xf]
      %v483 = vld [vmem:[%s2 + $0x1c] sm:$0xf]
      %v484 = vld [vmem:[%s2 + $0x20] sm:$0xf]
      %v485 = vld [vmem:[%s2 + $0x24] sm:$0xf]
      %v486 = vld [vmem:[%s2 + $0x28] sm:$0xf]
      %v487 = vld [vmem:[%s2 + $0x2c] sm:$0xf]
      %v488 = vld [vmem:[%s2 + $0x30] sm:$0xf]
      %v489 = vld [vmem:[%s2 + $0x34] sm:$0xf]
      %v490 = vld [vmem:[%s2 + $0x38] sm:$0xf]
      %v491 = vld [vmem:[%s2 + $0x3c] sm:$0xf]
      %v508 = vunpack.c.l.b16 %v476
      %v509 = vunpack.c.l.b16 %v477
      %v510 = vunpack.c.l.b16 %v478
      %v511 = vunpack.c.l.b16 %v479
      %v512 = vunpack.c.l.b16 %v480
      %v513 = vunpack.c.l.b16 %v481
      %v514 = vunpack.c.l.b16 %v482
      %v515 = vunpack.c.l.b16 %v483
      %v516 = vunpack.c.l.b16 %v484
      %v517 = vunpack.c.l.b16 %v485
      %v518 = vunpack.c.l.b16 %v486
      %v519 = vunpack.c.l.b16 %v487
      %v520 = vunpack.c.l.b16 %v488
      %v521 = vunpack.c.l.b16 %v489
      %v522 = vunpack.c.l.b16 %v490
      %v523 = vunpack.c.l.b16 %v491
      %v524 = vpack.c.b16 %v509, %v508
      %v525 = vpack.c.b16 %v511, %v510
      %v526 = vpack.c.b16 %v513, %v512
      %v527 = vpack.c.b16 %v515, %v514
      %v528 = vpack.c.b16 %v517, %v516
      %v529 = vpack.c.b16 %v519, %v518
      %v530 = vpack.c.b16 %v521, %v520
      %v531 = vpack.c.b16 %v523, %v522
      %540 = vmatprep.subr.bf16.mxu0 0
      %541 = vmatpush1.bf16.msra.mxu0 %v531
      %542 = vmatprep.subr.bf16.mxu0 0
      %543 = vmatpush1.bf16.msra.mxu0 %v530
      %544 = vmatprep.subr.bf16.mxu0 0
      %545 = vmatpush1.bf16.msra.mxu0 %v529
      %546 = vmatprep.subr.bf16.mxu0 0
      %547 = vmatpush1.bf16.msra.mxu0 %v528
      %548 = vmatprep.subr.bf16.mxu0 0
      %549 = vmatpush1.bf16.msra.mxu0 %v527
      %550 = vmatprep.subr.bf16.mxu0 0
      %551 = vmatpush1.bf16.msra.mxu0 %v526
      %552 = vmatprep.subr.bf16.mxu0 0
      %553 = vmatpush1.bf16.msra.mxu0 %v525
      %554 = vmatprep.subr.bf16.mxu0 0
      %555 = vmatpush1.bf16.msra.mxu0 %v524
      %556 = vmatprep.subr.bf16.mxu0 0
      %557 = vmatpush2.bf16.msra.mxu0 0
      %558 = vmatprep.subr.bf16.mxu0 0
      %559 = vmatpush2.bf16.msra.mxu0 0
      %560 = vmatprep.subr.bf16.mxu0 0
      %561 = vmatpush2.bf16.msra.mxu0 0
      %562 = vmatprep.subr.bf16.mxu0 0
      %563 = vmatpush2.bf16.msra.mxu0 0
      %564 = vmatprep.subr.bf16.mxu0 0
      %565 = vmatpush2.bf16.msra.mxu0 0
      %566 = vmatprep.subr.bf16.mxu0 0
      %567 = vmatpush2.bf16.msra.mxu0 0
      %568 = vmatprep.subr.bf16.mxu0 0
      %569 = vmatpush2.bf16.msra.mxu0 0
      %570 = vmatprep.subr.bf16.mxu0 0
      %571 = vmatpush2.bf16.msra.mxu0 0
      %572 = vmatprep.mubr.bf16.mxu0 0
      %573 = vmatmul.mubr.bf16.gmra.mxu0 %v472
      %v574 = vpop.f32.mrf.mxu0
      %v575 = vadd.f32 0.0, %v574
      %v576 = vpop.f32.mrf.mxu0
      %v577 = vpop.f32.mrf.mxu0
      %v578 = vadd.f32 0.0, %v577
      %v579 = vpop.f32.mrf.mxu0
      %580 = vmatprep.mubr.bf16.mxu0 0
      %581 = vmatmul.mubr.bf16.gmra.mxu0 %v473
      %v582 = vpop.f32.mrf.mxu0
      %v583 = vadd.f32 0.0, %v582
      %v584 = vpop.f32.mrf.mxu0
      %v585 = vpop.f32.mrf.mxu0
      %v586 = vadd.f32 0.0, %v585
      %v587 = vpop.f32.mrf.mxu0
      %588 = vmatprep.mubr.bf16.mxu0 0
      %589 = vmatmul.mubr.bf16.gmra.mxu0 %v474
      %v590 = vpop.f32.mrf.mxu0
      %v591 = vadd.f32 0.0, %v590
      %v592 = vpop.f32.mrf.mxu0
      %v593 = vpop.f32.mrf.mxu0
      %v594 = vadd.f32 0.0, %v593
      %v595 = vpop.f32.mrf.mxu0
      %596 = vmatprep.mubr.bf16.mxu0 0
      %597 = vmatmul.mubr.bf16.gmra.mxu0 %v475
      %v598 = vpop.f32.mrf.mxu0
      %v599 = vadd.f32 0.0, %v598
      %v600 = vpop.f32.mrf.mxu0
      %v601 = vpop.f32.mrf.mxu0
      %v602 = vadd.f32 0.0, %v601
      %v603 = vpop.f32.mrf.mxu0
      %604 = vdwg.mxu0
      %v605 = vmax.f32 %v575, 0.0
      %v606 = vmax.f32 %v578, 0.0
      %v607 = vmax.f32 %v583, 0.0
      %v608 = vmax.f32 %v586, 0.0
      %v609 = vmax.f32 %v591, 0.0
      %v610 = vmax.f32 %v594, 0.0
      %v611 = vmax.f32 %v599, 0.0
      %v612 = vmax.f32 %v602, 0.0
      %v613 = vmin.f32 %v605, 1.0
      %v614 = vmin.f32 %v606, 1.0
      %v615 = vmin.f32 %v607, 1.0
      %v616 = vmin.f32 %v608, 1.0
      %v617 = vmin.f32 %v609, 1.0
      %v618 = vmin.f32 %v610, 1.0
      %v619 = vmin.f32 %v611, 1.0
      %v620 = vmin.f32 %v612, 1.0
      %v621 = vpack.c.bf16 %v614, %v613
      %v622 = vpack.c.bf16 %v616, %v615
      %v623 = vpack.c.bf16 %v618, %v617
      %v624 = vpack.c.bf16 %v620, %v619
      %v625 = vld [vmem:[%s3] sm:$0xf]
      %v626 = vld [vmem:[%s3 + $0x4] sm:$0xf]
      %v627 = vld [vmem:[%s3 + $0x8] sm:$0xf]
      %v628 = vld [vmem:[%s3 + $0xc] sm:$0xf]
      %v629 = vld [vmem:[%s3 + $0x10] sm:$0xf]
      %v630 = vld [vmem:[%s3 + $0x14] sm:$0xf]
      %v631 = vld [vmem:[%s3 + $0x18] sm:$0xf]
      %v632 = vld [vmem:[%s3 + $0x1c] sm:$0xf]
      %v633 = vld [vmem:[%s3 + $0x20] sm:$0xf]
      %v634 = vld [vmem:[%s3 + $0x24] sm:$0xf]
      %v635 = vld [vmem:[%s3 + $0x28] sm:$0xf]
      %v636 = vld [vmem:[%s3 + $0x2c] sm:$0xf]
      %v637 = vld [vmem:[%s3 + $0x30] sm:$0xf]
      %v638 = vld [vmem:[%s3 + $0x34] sm:$0xf]
      %v639 = vld [vmem:[%s3 + $0x38] sm:$0xf]
      %v640 = vld [vmem:[%s3 + $0x3c] sm:$0xf]
      %v657 = vunpack.c.l.b16 %v625
      %v658 = vunpack.c.l.b16 %v626
      %v659 = vunpack.c.l.b16 %v627
      %v660 = vunpack.c.l.b16 %v628
      %v661 = vunpack.c.l.b16 %v629
      %v662 = vunpack.c.l.b16 %v630
      %v663 = vunpack.c.l.b16 %v631
      %v664 = vunpack.c.l.b16 %v632
      %v665 = vunpack.c.l.b16 %v633
      %v666 = vunpack.c.l.b16 %v634
      %v667 = vunpack.c.l.b16 %v635
      %v668 = vunpack.c.l.b16 %v636
      %v669 = vunpack.c.l.b16 %v637
      %v670 = vunpack.c.l.b16 %v638
      %v671 = vunpack.c.l.b16 %v639
      %v672 = vunpack.c.l.b16 %v640
      %v673 = vpack.c.b16 %v658, %v657
      %v674 = vpack.c.b16 %v660, %v659
      %v675 = vpack.c.b16 %v662, %v661
      %v676 = vpack.c.b16 %v664, %v663
      %v677 = vpack.c.b16 %v666, %v665
      %v678 = vpack.c.b16 %v668, %v667
      %v679 = vpack.c.b16 %v670, %v669
      %v680 = vpack.c.b16 %v672, %v671
      %689 = vmatprep.subr.bf16.mxu0 0
      %690 = vmatpush1.bf16.msra.mxu0 %v680
      %691 = vmatprep.subr.bf16.mxu0 0
      %692 = vmatpush1.bf16.msra.mxu0 %v679
      %693 = vmatprep.subr.bf16.mxu0 0
      %694 = vmatpush1.bf16.msra.mxu0 %v678
      %695 = vmatprep.subr.bf16.mxu0 0
      %696 = vmatpush1.bf16.msra.mxu0 %v677
      %697 = vmatprep.subr.bf16.mxu0 0
      %698 = vmatpush1.bf16.msra.mxu0 %v676
      %699 = vmatprep.subr.bf16.mxu0 0
      %700 = vmatpush1.bf16.msra.mxu0 %v675
      %701 = vmatprep.subr.bf16.mxu0 0
      %702 = vmatpush1.bf16.msra.mxu0 %v674
      %703 = vmatprep.subr.bf16.mxu0 0
      %704 = vmatpush1.bf16.msra.mxu0 %v673
      %705 = vmatprep.subr.bf16.mxu0 0
      %706 = vmatpush2.bf16.msra.mxu0 0
      %707 = vmatprep.subr.bf16.mxu0 0
      %708 = vmatpush2.bf16.msra.mxu0 0
      %709 = vmatprep.subr.bf16.mxu0 0
      %710 = vmatpush2.bf16.msra.mxu0 0
      %711 = vmatprep.subr.bf16.mxu0 0
      %712 = vmatpush2.bf16.msra.mxu0 0
      %713 = vmatprep.subr.bf16.mxu0 0
      %714 = vmatpush2.bf16.msra.mxu0 0
      %715 = vmatprep.subr.bf16.mxu0 0
      %716 = vmatpush2.bf16.msra.mxu0 0
      %717 = vmatprep.subr.bf16.mxu0 0
      %718 = vmatpush2.bf16.msra.mxu0 0
      %719 = vmatprep.subr.bf16.mxu0 0
      %720 = vmatpush2.bf16.msra.mxu0 0
      %721 = vmatprep.mubr.bf16.mxu0 0
      %722 = vmatmul.mubr.bf16.gmra.mxu0 %v621
      %v723 = vpop.f32.mrf.mxu0
      %v724 = vadd.f32 0.0, %v723
      %v725 = vpop.f32.mrf.mxu0
      %v726 = vpop.f32.mrf.mxu0
      %v727 = vadd.f32 0.0, %v726
      %v728 = vpop.f32.mrf.mxu0
      %729 = vmatprep.mubr.bf16.mxu0 0
      %730 = vmatmul.mubr.bf16.gmra.mxu0 %v622
      %v731 = vpop.f32.mrf.mxu0
      %v732 = vadd.f32 0.0, %v731
      %v733 = vpop.f32.mrf.mxu0
      %v734 = vpop.f32.mrf.mxu0
      %v735 = vadd.f32 0.0, %v734
      %v736 = vpop.f32.mrf.mxu0
      %737 = vmatprep.mubr.bf16.mxu0 0
      %738 = vmatmul.mubr.bf16.gmra.mxu0 %v623
      %v739 = vpop.f32.mrf.mxu0
      %v740 = vadd.f32 0.0, %v739
      %v741 = vpop.f32.mrf.mxu0
      %v742 = vpop.f32.mrf.mxu0
      %v743 = vadd.f32 0.0, %v742
      %v744 = vpop.f32.mrf.mxu0
      %745 = vmatprep.mubr.bf16.mxu0 0
      %746 = vmatmul.mubr.bf16.gmra.mxu0 %v624
      %v747 = vpop.f32.mrf.mxu0
      %v748 = vadd.f32 0.0, %v747
      %v749 = vpop.f32.mrf.mxu0
      %v750 = vpop.f32.mrf.mxu0
      %v751 = vadd.f32 0.0, %v750
      %v752 = vpop.f32.mrf.mxu0
      %753 = vdwg.mxu0
      %v754 = vpack.c.bf16 %v727, %v724
      %v755 = vpack.c.bf16 %v735, %v732
      %v756 = vpack.c.bf16 %v743, %v740
      %v757 = vpack.c.bf16 %v751, %v748
      %v762 = vunpack.c.l.b16 %v754
      %v763 = vunpack.c.h.b16 %v754
      %v764 = vunpack.c.l.b16 %v755
      %v765 = vunpack.c.h.b16 %v755
      %v766 = vunpack.c.l.b16 %v756
      %v767 = vunpack.c.h.b16 %v756
      %v768 = vunpack.c.l.b16 %v757
      %v769 = vunpack.c.h.b16 %v757
      %v770 = vpack.c.b16 %v762, %v762
      %v771 = vpack.c.b16 %v763, %v763
      %v772 = vpack.c.b16 %v764, %v764
      %v773 = vpack.c.b16 %v765, %v765
      %v774 = vpack.c.b16 %v766, %v766
      %v775 = vpack.c.b16 %v767, %v767
      %v776 = vpack.c.b16 %v768, %v768
      %v777 = vpack.c.b16 %v769, %v769
      %786 = vst [vmem:[#allocation2] sm:$0xf] %v770
      %787 = vst [vmem:[#allocation2 + $0x4] sm:$0xf] %v771
      %788 = vst [vmem:[#allocation2 + $0x8] sm:$0xf] %v772
      %789 = vst [vmem:[#allocation2 + $0xc] sm:$0xf] %v773
      %790 = vst [vmem:[#allocation2 + $0x10] sm:$0xf] %v774
      %791 = vst [vmem:[#allocation2 + $0x14] sm:$0xf] %v775
      %792 = vst [vmem:[#allocation2 + $0x18] sm:$0xf] %v776
      %793 = vst [vmem:[#allocation2 + $0x1c] sm:$0xf] %v777
      %s794 = scalar_lea.vmem %s3, 64
      %v795 = vld [vmem:[%s794] sm:$0xf]
      %v796 = vld [vmem:[%s794 + $0x4] sm:$0xf]
      %v797 = vld [vmem:[%s794 + $0x8] sm:$0xf]
      %v798 = vld [vmem:[%s794 + $0xc] sm:$0xf]
      %v799 = vld [vmem:[%s794 + $0x10] sm:$0xf]
      %v800 = vld [vmem:[%s794 + $0x14] sm:$0xf]
      %v801 = vld [vmem:[%s794 + $0x18] sm:$0xf]
      %v802 = vld [vmem:[%s794 + $0x1c] sm:$0xf]
      %v803 = vld [vmem:[%s794 + $0x20] sm:$0xf]
      %v804 = vld [vmem:[%s794 + $0x24] sm:$0xf]
      %v805 = vld [vmem:[%s794 + $0x28] sm:$0xf]
      %v806 = vld [vmem:[%s794 + $0x2c] sm:$0xf]
      %v807 = vld [vmem:[%s794 + $0x30] sm:$0xf]
      %v808 = vld [vmem:[%s794 + $0x34] sm:$0xf]
      %v809 = vld [vmem:[%s794 + $0x38] sm:$0xf]
      %v810 = vld [vmem:[%s794 + $0x3c] sm:$0xf]
      %v827 = vunpack.c.l.b16 %v795
      %v828 = vunpack.c.l.b16 %v796
      %v829 = vunpack.c.l.b16 %v797
      %v830 = vunpack.c.l.b16 %v798
      %v831 = vunpack.c.l.b16 %v799
      %v832 = vunpack.c.l.b16 %v800
      %v833 = vunpack.c.l.b16 %v801
      %v834 = vunpack.c.l.b16 %v802
      %v835 = vunpack.c.l.b16 %v803
      %v836 = vunpack.c.l.b16 %v804
      %v837 = vunpack.c.l.b16 %v805
      %v838 = vunpack.c.l.b16 %v806
      %v839 = vunpack.c.l.b16 %v807
      %v840 = vunpack.c.l.b16 %v808
      %v841 = vunpack.c.l.b16 %v809
      %v842 = vunpack.c.l.b16 %v810
      %v843 = vpack.c.b16 %v828, %v827
      %v844 = vpack.c.b16 %v830, %v829
      %v845 = vpack.c.b16 %v832, %v831
      %v846 = vpack.c.b16 %v834, %v833
      %v847 = vpack.c.b16 %v836, %v835
      %v848 = vpack.c.b16 %v838, %v837
      %v849 = vpack.c.b16 %v840, %v839
      %v850 = vpack.c.b16 %v842, %v841
      %859 = vmatprep.subr.bf16.mxu0 0
      %860 = vmatpush1.bf16.msra.mxu0 %v850
      %861 = vmatprep.subr.bf16.mxu0 0
      %862 = vmatpush1.bf16.msra.mxu0 %v849
      %863 = vmatprep.subr.bf16.mxu0 0
      %864 = vmatpush1.bf16.msra.mxu0 %v848
      %865 = vmatprep.subr.bf16.mxu0 0
      %866 = vmatpush1.bf16.msra.mxu0 %v847
      %867 = vmatprep.subr.bf16.mxu0 0
      %868 = vmatpush1.bf16.msra.mxu0 %v846
      %869 = vmatprep.subr.bf16.mxu0 0
      %870 = vmatpush1.bf16.msra.mxu0 %v845
      %871 = vmatprep.subr.bf16.mxu0 0
      %872 = vmatpush1.bf16.msra.mxu0 %v844
      %873 = vmatprep.subr.bf16.mxu0 0
      %874 = vmatpush1.bf16.msra.mxu0 %v843
      %875 = vmatprep.subr.bf16.mxu0 0
      %876 = vmatpush2.bf16.msra.mxu0 0
      %877 = vmatprep.subr.bf16.mxu0 0
      %878 = vmatpush2.bf16.msra.mxu0 0
      %879 = vmatprep.subr.bf16.mxu0 0
      %880 = vmatpush2.bf16.msra.mxu0 0
      %881 = vmatprep.subr.bf16.mxu0 0
      %882 = vmatpush2.bf16.msra.mxu0 0
      %883 = vmatprep.subr.bf16.mxu0 0
      %884 = vmatpush2.bf16.msra.mxu0 0
      %885 = vmatprep.subr.bf16.mxu0 0
      %886 = vmatpush2.bf16.msra.mxu0 0
      %887 = vmatprep.subr.bf16.mxu0 0
      %888 = vmatpush2.bf16.msra.mxu0 0
      %889 = vmatprep.subr.bf16.mxu0 0
      %890 = vmatpush2.bf16.msra.mxu0 0
      %891 = vmatprep.mubr.bf16.mxu0 0
      %892 = vmatmul.mubr.bf16.gmra.mxu0 %v621
      %v893 = vpop.f32.mrf.mxu0
      %v894 = vadd.f32 0.0, %v893
      %v895 = vpop.f32.mrf.mxu0
      %v896 = vpop.f32.mrf.mxu0
      %v897 = vadd.f32 0.0, %v896
      %v898 = vpop.f32.mrf.mxu0
      %899 = vmatprep.mubr.bf16.mxu0 0
      %900 = vmatmul.mubr.bf16.gmra.mxu0 %v622
      %v901 = vpop.f32.mrf.mxu0
      %v902 = vadd.f32 0.0, %v901
      %v903 = vpop.f32.mrf.mxu0
      %v904 = vpop.f32.mrf.mxu0
      %v905 = vadd.f32 0.0, %v904
      %v906 = vpop.f32.mrf.mxu0
      %907 = vmatprep.mubr.bf16.mxu0 0
      %908 = vmatmul.mubr.bf16.gmra.mxu0 %v623
      %v909 = vpop.f32.mrf.mxu0
      %v910 = vadd.f32 0.0, %v909
      %v911 = vpop.f32.mrf.mxu0
      %v912 = vpop.f32.mrf.mxu0
      %v913 = vadd.f32 0.0, %v912
      %v914 = vpop.f32.mrf.mxu0
      %915 = vmatprep.mubr.bf16.mxu0 0
      %916 = vmatmul.mubr.bf16.gmra.mxu0 %v624
      %v917 = vpop.f32.mrf.mxu0
      %v918 = vadd.f32 0.0, %v917
      %v919 = vpop.f32.mrf.mxu0
      %v920 = vpop.f32.mrf.mxu0
      %v921 = vadd.f32 0.0, %v920
      %v922 = vpop.f32.mrf.mxu0
      %923 = vdwg.mxu0
      %v924 = vpack.c.bf16 %v897, %v894
      %v925 = vpack.c.bf16 %v905, %v902
      %v926 = vpack.c.bf16 %v913, %v910
      %v927 = vpack.c.bf16 %v921, %v918
      %v932 = vunpack.c.l.b16 %v924
      %v933 = vunpack.c.h.b16 %v924
      %v934 = vunpack.c.l.b16 %v925
      %v935 = vunpack.c.h.b16 %v925
      %v936 = vunpack.c.l.b16 %v926
      %v937 = vunpack.c.h.b16 %v926
      %v938 = vunpack.c.l.b16 %v927
      %v939 = vunpack.c.h.b16 %v927
      %v940 = vpack.c.b16 %v932, %v932
      %v941 = vpack.c.b16 %v933, %v933
      %v942 = vpack.c.b16 %v934, %v934
      %v943 = vpack.c.b16 %v935, %v935
      %v944 = vpack.c.b16 %v936, %v936
      %v945 = vpack.c.b16 %v937, %v937
      %v946 = vpack.c.b16 %v938, %v938
      %v947 = vpack.c.b16 %v939, %v939
      %956 = vst [vmem:[#allocation2 + $0x20] sm:$0xf] %v940
      %957 = vst [vmem:[#allocation2 + $0x24] sm:$0xf] %v941
      %958 = vst [vmem:[#allocation2 + $0x28] sm:$0xf] %v942
      %959 = vst [vmem:[#allocation2 + $0x2c] sm:$0xf] %v943
      %960 = vst [vmem:[#allocation2 + $0x30] sm:$0xf] %v944
      %961 = vst [vmem:[#allocation2 + $0x34] sm:$0xf] %v945
      %962 = vst [vmem:[#allocation2 + $0x38] sm:$0xf] %v946
      %963 = vst [vmem:[#allocation2 + $0x3c] sm:$0xf] %v947
      %s964 = scalar_lea.vmem %s3, 128
      %v965 = vld [vmem:[%s964] sm:$0xf]
      %v966 = vld [vmem:[%s964 + $0x4] sm:$0xf]
      %v967 = vld [vmem:[%s964 + $0x8] sm:$0xf]
      %v968 = vld [vmem:[%s964 + $0xc] sm:$0xf]
      %v969 = vld [vmem:[%s964 + $0x10] sm:$0xf]
      %v970 = vld [vmem:[%s964 + $0x14] sm:$0xf]
      %v971 = vld [vmem:[%s964 + $0x18] sm:$0xf]
      %v972 = vld [vmem:[%s964 + $0x1c] sm:$0xf]
      %v973 = vld [vmem:[%s964 + $0x20] sm:$0xf]
      %v974 = vld [vmem:[%s964 + $0x24] sm:$0xf]
      %v975 = vld [vmem:[%s964 + $0x28] sm:$0xf]
      %v976 = vld [vmem:[%s964 + $0x2c] sm:$0xf]
      %v977 = vld [vmem:[%s964 + $0x30] sm:$0xf]
      %v978 = vld [vmem:[%s964 + $0x34] sm:$0xf]
      %v979 = vld [vmem:[%s964 + $0x38] sm:$0xf]
      %v980 = vld [vmem:[%s964 + $0x3c] sm:$0xf]
      %v997 = vunpack.c.l.b16 %v965
      %v998 = vunpack.c.l.b16 %v966
      %v999 = vunpack.c.l.b16 %v967
      %v1000 = vunpack.c.l.b16 %v968
      %v1001 = vunpack.c.l.b16 %v969
      %v1002 = vunpack.c.l.b16 %v970
      %v1003 = vunpack.c.l.b16 %v971
      %v1004 = vunpack.c.l.b16 %v972
      %v1005 = vunpack.c.l.b16 %v973
      %v1006 = vunpack.c.l.b16 %v974
      %v1007 = vunpack.c.l.b16 %v975
      %v1008 = vunpack.c.l.b16 %v976
      %v1009 = vunpack.c.l.b16 %v977
      %v1010 = vunpack.c.l.b16 %v978
      %v1011 = vunpack.c.l.b16 %v979
      %v1012 = vunpack.c.l.b16 %v980
      %v1013 = vpack.c.b16 %v998, %v997
      %v1014 = vpack.c.b16 %v1000, %v999
      %v1015 = vpack.c.b16 %v1002, %v1001
      %v1016 = vpack.c.b16 %v1004, %v1003
      %v1017 = vpack.c.b16 %v1006, %v1005
      %v1018 = vpack.c.b16 %v1008, %v1007
      %v1019 = vpack.c.b16 %v1010, %v1009
      %v1020 = vpack.c.b16 %v1012, %v1011
      %1029 = vmatprep.subr.bf16.mxu0 0
      %1030 = vmatpush1.bf16.msra.mxu0 %v1020
      %1031 = vmatprep.subr.bf16.mxu0 0
      %1032 = vmatpush1.bf16.msra.mxu0 %v1019
      %1033 = vmatprep.subr.bf16.mxu0 0
      %1034 = vmatpush1.bf16.msra.mxu0 %v1018
      %1035 = vmatprep.subr.bf16.mxu0 0
      %1036 = vmatpush1.bf16.msra.mxu0 %v1017
      %1037 = vmatprep.subr.bf16.mxu0 0
      %1038 = vmatpush1.bf16.msra.mxu0 %v1016
      %1039 = vmatprep.subr.bf16.mxu0 0
      %1040 = vmatpush1.bf16.msra.mxu0 %v1015
      %1041 = vmatprep.subr.bf16.mxu0 0
      %1042 = vmatpush1.bf16.msra.mxu0 %v1014
      %1043 = vmatprep.subr.bf16.mxu0 0
      %1044 = vmatpush1.bf16.msra.mxu0 %v1013
      %1045 = vmatprep.subr.bf16.mxu0 0
      %1046 = vmatpush2.bf16.msra.mxu0 0
      %1047 = vmatprep.subr.bf16.mxu0 0
      %1048 = vmatpush2.bf16.msra.mxu0 0
      %1049 = vmatprep.subr.bf16.mxu0 0
      %1050 = vmatpush2.bf16.msra.mxu0 0
      %1051 = vmatprep.subr.bf16.mxu0 0
      %1052 = vmatpush2.bf16.msra.mxu0 0
      %1053 = vmatprep.subr.bf16.mxu0 0
      %1054 = vmatpush2.bf16.msra.mxu0 0
      %1055 = vmatprep.subr.bf16.mxu0 0
      %1056 = vmatpush2.bf16.msra.mxu0 0
      %1057 = vmatprep.subr.bf16.mxu0 0
      %1058 = vmatpush2.bf16.msra.mxu0 0
      %1059 = vmatprep.subr.bf16.mxu0 0
      %1060 = vmatpush2.bf16.msra.mxu0 0
      %1061 = vmatprep.mubr.bf16.mxu0 0
      %1062 = vmatmul.mubr.bf16.gmra.mxu0 %v621
      %v1063 = vpop.f32.mrf.mxu0
      %v1064 = vadd.f32 0.0, %v1063
      %v1065 = vpop.f32.mrf.mxu0
      %v1066 = vpop.f32.mrf.mxu0
      %v1067 = vadd.f32 0.0, %v1066
      %v1068 = vpop.f32.mrf.mxu0
      %1069 = vmatprep.mubr.bf16.mxu0 0
      %1070 = vmatmul.mubr.bf16.gmra.mxu0 %v622
      %v1071 = vpop.f32.mrf.mxu0
      %v1072 = vadd.f32 0.0, %v1071
      %v1073 = vpop.f32.mrf.mxu0
      %v1074 = vpop.f32.mrf.mxu0
      %v1075 = vadd.f32 0.0, %v1074
      %v1076 = vpop.f32.mrf.mxu0
      %1077 = vmatprep.mubr.bf16.mxu0 0
      %1078 = vmatmul.mubr.bf16.gmra.mxu0 %v623
      %v1079 = vpop.f32.mrf.mxu0
      %v1080 = vadd.f32 0.0, %v1079
      %v1081 = vpop.f32.mrf.mxu0
      %v1082 = vpop.f32.mrf.mxu0
      %v1083 = vadd.f32 0.0, %v1082
      %v1084 = vpop.f32.mrf.mxu0
      %1085 = vmatprep.mubr.bf16.mxu0 0
      %1086 = vmatmul.mubr.bf16.gmra.mxu0 %v624
      %v1087 = vpop.f32.mrf.mxu0
      %v1088 = vadd.f32 0.0, %v1087
      %v1089 = vpop.f32.mrf.mxu0
      %v1090 = vpop.f32.mrf.mxu0
      %v1091 = vadd.f32 0.0, %v1090
      %v1092 = vpop.f32.mrf.mxu0
      %1093 = vdwg.mxu0
      %v1094 = vpack.c.bf16 %v1067, %v1064
      %v1095 = vpack.c.bf16 %v1075, %v1072
      %v1096 = vpack.c.bf16 %v1083, %v1080
      %v1097 = vpack.c.bf16 %v1091, %v1088
      %v1102 = vunpack.c.l.b16 %v1094
      %v1103 = vunpack.c.h.b16 %v1094
      %v1104 = vunpack.c.l.b16 %v1095
      %v1105 = vunpack.c.h.b16 %v1095
      %v1106 = vunpack.c.l.b16 %v1096
      %v1107 = vunpack.c.h.b16 %v1096
      %v1108 = vunpack.c.l.b16 %v1097
      %v1109 = vunpack.c.h.b16 %v1097
      %v1110 = vpack.c.b16 %v1102, %v1102
      %v1111 = vpack.c.b16 %v1103, %v1103
      %v1112 = vpack.c.b16 %v1104, %v1104
      %v1113 = vpack.c.b16 %v1105, %v1105
      %v1114 = vpack.c.b16 %v1106, %v1106
      %v1115 = vpack.c.b16 %v1107, %v1107
      %v1116 = vpack.c.b16 %v1108, %v1108
      %v1117 = vpack.c.b16 %v1109, %v1109
      %1126 = vst [vmem:[#allocation2 + $0x40] sm:$0xf] %v1110
      %1127 = vst [vmem:[#allocation2 + $0x44] sm:$0xf] %v1111
      %1128 = vst [vmem:[#allocation2 + $0x48] sm:$0xf] %v1112
      %1129 = vst [vmem:[#allocation2 + $0x4c] sm:$0xf] %v1113
      %1130 = vst [vmem:[#allocation2 + $0x50] sm:$0xf] %v1114
      %1131 = vst [vmem:[#allocation2 + $0x54] sm:$0xf] %v1115
      %1132 = vst [vmem:[#allocation2 + $0x58] sm:$0xf] %v1116
      %1133 = vst [vmem:[#allocation2 + $0x5c] sm:$0xf] %v1117
      %v1134 = vld [vmem:[%s4] sm:$0xff]
      %v1135 = vld [vmem:[%s4 + $0x8] sm:$0xff]
      %v1136 = vld [vmem:[%s4 + $0x10] sm:$0xff]
      %v1137 = vld [vmem:[%s4 + $0x18] sm:$0xff]
      %v1138 = vld [vmem:[%s4 + $0x20] sm:$0xff]
      %v1139 = vld [vmem:[%s4 + $0x28] sm:$0xff]
      %v1140 = vld [vmem:[%s4 + $0x30] sm:$0xff]
      %v1141 = vld [vmem:[%s4 + $0x38] sm:$0xff]
      %v1142 = vld [vmem:[%s4 + $0x40] sm:$0xff]
      %v1143 = vld [vmem:[%s4 + $0x48] sm:$0xff]
      %v1144 = vld [vmem:[%s4 + $0x50] sm:$0xff]
      %v1145 = vld [vmem:[%s4 + $0x58] sm:$0xff]
      %v1146 = vld [vmem:[%s4 + $0x60] sm:$0xff]
      %v1147 = vld [vmem:[%s4 + $0x68] sm:$0xff]
      %v1148 = vld [vmem:[%s4 + $0x70] sm:$0xff]
      %v1149 = vld [vmem:[%s4 + $0x78] sm:$0xff]
      %v1150 = vld [vmem:[#allocation2] sm:$0xf]
      %v1151 = vld [vmem:[#allocation2 + $0x4] sm:$0xf]
      %v1152 = vld [vmem:[#allocation2 + $0x8] sm:$0xf]
      %v1153 = vld [vmem:[#allocation2 + $0xc] sm:$0xf]
      %v1154 = vld [vmem:[#allocation2 + $0x10] sm:$0xf]
      %v1155 = vld [vmem:[#allocation2 + $0x14] sm:$0xf]
      %v1156 = vld [vmem:[#allocation2 + $0x18] sm:$0xf]
      %v1157 = vld [vmem:[#allocation2 + $0x1c] sm:$0xf]
      %v1158 = vld [vmem:[#allocation2 + $0x20] sm:$0xf]
      %v1159 = vld [vmem:[#allocation2 + $0x24] sm:$0xf]
      %v1160 = vld [vmem:[#allocation2 + $0x28] sm:$0xf]
      %v1161 = vld [vmem:[#allocation2 + $0x2c] sm:$0xf]
      %v1162 = vld [vmem:[#allocation2 + $0x30] sm:$0xf]
      %v1163 = vld [vmem:[#allocation2 + $0x34] sm:$0xf]
      %v1164 = vld [vmem:[#allocation2 + $0x38] sm:$0xf]
      %v1165 = vld [vmem:[#allocation2 + $0x3c] sm:$0xf]
      %v1166 = vld [vmem:[#allocation2 + $0x40] sm:$0xf]
      %v1167 = vld [vmem:[#allocation2 + $0x44] sm:$0xf]
      %v1168 = vld [vmem:[#allocation2 + $0x48] sm:$0xf]
      %v1169 = vld [vmem:[#allocation2 + $0x4c] sm:$0xf]
      %v1170 = vld [vmem:[#allocation2 + $0x50] sm:$0xf]
      %v1171 = vld [vmem:[#allocation2 + $0x54] sm:$0xf]
      %v1172 = vld [vmem:[#allocation2 + $0x58] sm:$0xf]
      %v1173 = vld [vmem:[#allocation2 + $0x5c] sm:$0xf]
      %v1174 = vld [vmem:[%s5] sm:$0xff]
      %v1175 = vld [vmem:[%s5 + $0x8] sm:$0xff]
      %v1176 = vld [vmem:[%s5 + $0x10] sm:$0xff]
      %v1177 = vld [vmem:[%s5 + $0x18] sm:$0xff]
      %v1178 = vld [vmem:[%s5 + $0x20] sm:$0xff]
      %v1179 = vld [vmem:[%s5 + $0x28] sm:$0xff]
      %v1180 = vld [vmem:[%s5 + $0x30] sm:$0xff]
      %v1181 = vld [vmem:[%s5 + $0x38] sm:$0xff]
      %v1182 = vld [vmem:[%s5 + $0x40] sm:$0xff]
      %v1183 = vld [vmem:[%s5 + $0x48] sm:$0xff]
      %v1184 = vld [vmem:[%s5 + $0x50] sm:$0xff]
      %v1185 = vld [vmem:[%s5 + $0x58] sm:$0xff]
      %v1186 = vld [vmem:[%s5 + $0x60] sm:$0xff]
      %v1187 = vld [vmem:[%s5 + $0x68] sm:$0xff]
      %v1188 = vld [vmem:[%s5 + $0x70] sm:$0xff]
      %v1189 = vld [vmem:[%s5 + $0x78] sm:$0xff]
      %1191 = vset.pattern.permute.xlu0 0
      %1192 = vperm.xlu0 %1191, %v1174
      %v1193 = vpop.permute.xlu0 %1192
      %1196 = vset.pattern.permute.xlu0 0
      %1197 = vperm.xlu0 %1196, %v1175
      %v1198 = vpop.permute.xlu0 %1197
      %1201 = vset.pattern.permute.xlu0 0
      %1202 = vperm.xlu0 %1201, %v1176
      %v1203 = vpop.permute.xlu0 %1202
      %1206 = vset.pattern.permute.xlu0 0
      %1207 = vperm.xlu0 %1206, %v1177
      %v1208 = vpop.permute.xlu0 %1207
      %1211 = vset.pattern.permute.xlu0 0
      %1212 = vperm.xlu0 %1211, %v1178
      %v1213 = vpop.permute.xlu0 %1212
      %1216 = vset.pattern.permute.xlu0 0
      %1217 = vperm.xlu0 %1216, %v1179
      %v1218 = vpop.permute.xlu0 %1217
      %1221 = vset.pattern.permute.xlu0 0
      %1222 = vperm.xlu0 %1221, %v1180
      %v1223 = vpop.permute.xlu0 %1222
      %1226 = vset.pattern.permute.xlu0 0
      %1227 = vperm.xlu0 %1226, %v1181
      %v1228 = vpop.permute.xlu0 %1227
      %1231 = vset.pattern.permute.xlu0 0
      %1232 = vperm.xlu0 %1231, %v1182
      %v1233 = vpop.permute.xlu0 %1232
      %1236 = vset.pattern.permute.xlu0 0
      %1237 = vperm.xlu0 %1236, %v1183
      %v1238 = vpop.permute.xlu0 %1237
      %1241 = vset.pattern.permute.xlu0 0
      %1242 = vperm.xlu0 %1241, %v1184
      %v1243 = vpop.permute.xlu0 %1242
      %1246 = vset.pattern.permute.xlu0 0
      %1247 = vperm.xlu0 %1246, %v1185
      %v1248 = vpop.permute.xlu0 %1247
      %1251 = vset.pattern.permute.xlu0 0
      %1252 = vperm.xlu0 %1251, %v1186
      %v1253 = vpop.permute.xlu0 %1252
      %1256 = vset.pattern.permute.xlu0 0
      %1257 = vperm.xlu0 %1256, %v1187
      %v1258 = vpop.permute.xlu0 %1257
      %1261 = vset.pattern.permute.xlu0 0
      %1262 = vperm.xlu0 %1261, %v1188
      %v1263 = vpop.permute.xlu0 %1262
      %1266 = vset.pattern.permute.xlu0 0
      %1267 = vperm.xlu0 %1266, %v1189
      %v1268 = vpop.permute.xlu0 %1267
      %v1286 = vunpack.c.l.b16 %v1134
      %v1287 = vunpack.c.h.b16 %v1134
      %v1288 = vunpack.c.l.b16 %v1135
      %v1289 = vunpack.c.h.b16 %v1135
      %v1290 = vunpack.c.l.b16 %v1136
      %v1291 = vunpack.c.h.b16 %v1136
      %v1292 = vunpack.c.l.b16 %v1137
      %v1293 = vunpack.c.h.b16 %v1137
      %v1294 = vunpack.c.l.b16 %v1138
      %v1295 = vunpack.c.h.b16 %v1138
      %v1296 = vunpack.c.l.b16 %v1139
      %v1297 = vunpack.c.h.b16 %v1139
      %v1298 = vunpack.c.l.b16 %v1140
      %v1299 = vunpack.c.h.b16 %v1140
      %v1300 = vunpack.c.l.b16 %v1141
      %v1301 = vunpack.c.h.b16 %v1141
      %v1302 = vunpack.c.l.b16 %v1142
      %v1303 = vunpack.c.h.b16 %v1142
      %v1304 = vunpack.c.l.b16 %v1143
      %v1305 = vunpack.c.h.b16 %v1143
      %v1306 = vunpack.c.l.b16 %v1144
      %v1307 = vunpack.c.h.b16 %v1144
      %v1308 = vunpack.c.l.b16 %v1145
      %v1309 = vunpack.c.h.b16 %v1145
      %v1310 = vunpack.c.l.b16 %v1146
      %v1311 = vunpack.c.h.b16 %v1146
      %v1312 = vunpack.c.l.b16 %v1147
      %v1313 = vunpack.c.h.b16 %v1147
      %v1314 = vunpack.c.l.b16 %v1148
      %v1315 = vunpack.c.h.b16 %v1148
      %v1316 = vunpack.c.l.b16 %v1149
      %v1317 = vunpack.c.h.b16 %v1149
      %v1318 = vpack.c.b16 %v1288, %v1286
      %v1319 = vpack.c.b16 %v1289, %v1287
      %v1320 = vpack.c.b16 %v1292, %v1290
      %v1321 = vpack.c.b16 %v1293, %v1291
      %v1322 = vpack.c.b16 %v1296, %v1294
      %v1323 = vpack.c.b16 %v1297, %v1295
      %v1324 = vpack.c.b16 %v1300, %v1298
      %v1325 = vpack.c.b16 %v1301, %v1299
      %v1326 = vpack.c.b16 %v1304, %v1302
      %v1327 = vpack.c.b16 %v1305, %v1303
      %v1328 = vpack.c.b16 %v1308, %v1306
      %v1329 = vpack.c.b16 %v1309, %v1307
      %v1330 = vpack.c.b16 %v1312, %v1310
      %v1331 = vpack.c.b16 %v1313, %v1311
      %v1332 = vpack.c.b16 %v1316, %v1314
      %v1333 = vpack.c.b16 %v1317, %v1315
      %v1366 = vunpack.c.l.b16 %v1150
      %v1367 = vunpack.c.l.b16 %v1151
      %v1368 = vunpack.c.l.b16 %v1152
      %v1369 = vunpack.c.l.b16 %v1153
      %v1370 = vunpack.c.l.b16 %v1154
      %v1371 = vunpack.c.l.b16 %v1155
      %v1372 = vunpack.c.l.b16 %v1156
      %v1373 = vunpack.c.l.b16 %v1157
      %v1374 = vunpack.c.l.b16 %v1158
      %v1375 = vunpack.c.l.b16 %v1159
      %v1376 = vunpack.c.l.b16 %v1160
      %v1377 = vunpack.c.l.b16 %v1161
      %v1378 = vunpack.c.l.b16 %v1162
      %v1379 = vunpack.c.l.b16 %v1163
      %v1380 = vunpack.c.l.b16 %v1164
      %v1381 = vunpack.c.l.b16 %v1165
      %v1382 = vunpack.c.l.b16 %v1166
      %v1383 = vunpack.c.l.b16 %v1167
      %v1384 = vunpack.c.l.b16 %v1168
      %v1385 = vunpack.c.l.b16 %v1169
      %v1386 = vunpack.c.l.b16 %v1170
      %v1387 = vunpack.c.l.b16 %v1171
      %v1388 = vunpack.c.l.b16 %v1172
      %v1389 = vunpack.c.l.b16 %v1173
      %v1390 = vpack.c.b16 %v1367, %v1366
      %v1391 = vpack.c.b16 %v1369, %v1368
      %v1392 = vpack.c.b16 %v1371, %v1370
      %v1393 = vpack.c.b16 %v1373, %v1372
      %v1394 = vpack.c.b16 %v1375, %v1374
      %v1395 = vpack.c.b16 %v1377, %v1376
      %v1396 = vpack.c.b16 %v1379, %v1378
      %v1397 = vpack.c.b16 %v1381, %v1380
      %v1398 = vpack.c.b16 %v1383, %v1382
      %v1399 = vpack.c.b16 %v1385, %v1384
      %v1400 = vpack.c.b16 %v1387, %v1386
      %v1401 = vpack.c.b16 %v1389, %v1388
      %v1415 = vsel %vm394, %v1319, 0
      %v1418 = vsel %vm394, %v1321, 0
      %v1421 = vsel %vm394, %v1323, 0
      %v1424 = vsel %vm394, %v1325, 0
      %v1427 = vsel %vm394, %v1327, 0
      %v1430 = vsel %vm394, %v1329, 0
      %v1433 = vsel %vm394, %v1331, 0
      %v1436 = vsel %vm394, %v1333, 0
      %1438 = vmatprep.subr.bf16.mxu0 0
      %1439 = vmatpush1.bf16.msra.mxu0 %v1397
      %1440 = vmatprep.subr.bf16.mxu0 0
      %1441 = vmatpush1.bf16.msra.mxu0 %v1396
      %1442 = vmatprep.subr.bf16.mxu0 0
      %1443 = vmatpush1.bf16.msra.mxu0 %v1395
      %1444 = vmatprep.subr.bf16.mxu0 0
      %1445 = vmatpush1.bf16.msra.mxu0 %v1394
      %1446 = vmatprep.subr.bf16.mxu0 0
      %1447 = vmatpush1.bf16.msra.mxu0 %v1393
      %1448 = vmatprep.subr.bf16.mxu0 0
      %1449 = vmatpush1.bf16.msra.mxu0 %v1392
      %1450 = vmatprep.subr.bf16.mxu0 0
      %1451 = vmatpush1.bf16.msra.mxu0 %v1391
      %1452 = vmatprep.subr.bf16.mxu0 0
      %1453 = vmatpush1.bf16.msra.mxu0 %v1390
      %1454 = vmatprep.subr.bf16.mxu0 0
      %1455 = vmatpush2.bf16.msra.mxu0 0
      %1456 = vmatprep.subr.bf16.mxu0 0
      %1457 = vmatpush2.bf16.msra.mxu0 0
      %1458 = vmatprep.subr.bf16.mxu0 0
      %1459 = vmatpush2.bf16.msra.mxu0 0
      %1460 = vmatprep.subr.bf16.mxu0 0
      %1461 = vmatpush2.bf16.msra.mxu0 0
      %1462 = vmatprep.subr.bf16.mxu0 0
      %1463 = vmatpush2.bf16.msra.mxu0 %v1401
      %1464 = vmatprep.subr.bf16.mxu0 0
      %1465 = vmatpush2.bf16.msra.mxu0 %v1400
      %1466 = vmatprep.subr.bf16.mxu0 0
      %1467 = vmatpush2.bf16.msra.mxu0 %v1399
      %1468 = vmatprep.subr.bf16.mxu0 0
      %1469 = vmatpush2.bf16.msra.mxu0 %v1398
      %1470 = vmatprep.mubr.bf16.mxu0 %v1415
      %1471 = vmatmul.mubr.bf16.gmra.mxu0 %v1318
      %v1472 = vpop.f32.mrf.mxu0
      %v1473 = vadd.f32 %v1193, %v1472
      %v1474 = vpop.f32.mrf.mxu0
      %v1475 = vpop.f32.mrf.mxu0
      %v1476 = vadd.f32 %v1198, %v1475
      %v1477 = vpop.f32.mrf.mxu0
      %1478 = vmatprep.mubr.bf16.mxu0 %v1418
      %1479 = vmatmul.mubr.bf16.gmra.mxu0 %v1320
      %v1480 = vpop.f32.mrf.mxu0
      %v1481 = vadd.f32 %v1203, %v1480
      %v1482 = vpop.f32.mrf.mxu0
      %v1483 = vpop.f32.mrf.mxu0
      %v1484 = vadd.f32 %v1208, %v1483
      %v1485 = vpop.f32.mrf.mxu0
      %1486 = vmatprep.mubr.bf16.mxu0 %v1421
      %1487 = vmatmul.mubr.bf16.gmra.mxu0 %v1322
      %v1488 = vpop.f32.mrf.mxu0
      %v1489 = vadd.f32 %v1213, %v1488
      %v1490 = vpop.f32.mrf.mxu0
      %v1491 = vpop.f32.mrf.mxu0
      %v1492 = vadd.f32 %v1218, %v1491
      %v1493 = vpop.f32.mrf.mxu0
      %1494 = vmatprep.mubr.bf16.mxu0 %v1424
      %1495 = vmatmul.mubr.bf16.gmra.mxu0 %v1324
      %v1496 = vpop.f32.mrf.mxu0
      %v1497 = vadd.f32 %v1223, %v1496
      %v1498 = vpop.f32.mrf.mxu0
      %v1499 = vpop.f32.mrf.mxu0
      %v1500 = vadd.f32 %v1228, %v1499
      %v1501 = vpop.f32.mrf.mxu0
      %1502 = vmatprep.mubr.bf16.mxu0 %v1427
      %1503 = vmatmul.mubr.bf16.gmra.mxu0 %v1326
      %v1504 = vpop.f32.mrf.mxu0
      %v1505 = vadd.f32 %v1233, %v1504
      %v1506 = vpop.f32.mrf.mxu0
      %v1507 = vpop.f32.mrf.mxu0
      %v1508 = vadd.f32 %v1238, %v1507
      %v1509 = vpop.f32.mrf.mxu0
      %1510 = vmatprep.mubr.bf16.mxu0 %v1430
      %1511 = vmatmul.mubr.bf16.gmra.mxu0 %v1328
      %v1512 = vpop.f32.mrf.mxu0
      %v1513 = vadd.f32 %v1243, %v1512
      %v1514 = vpop.f32.mrf.mxu0
      %v1515 = vpop.f32.mrf.mxu0
      %v1516 = vadd.f32 %v1248, %v1515
      %v1517 = vpop.f32.mrf.mxu0
      %1518 = vmatprep.mubr.bf16.mxu0 %v1433
      %1519 = vmatmul.mubr.bf16.gmra.mxu0 %v1330
      %v1520 = vpop.f32.mrf.mxu0
      %v1521 = vadd.f32 %v1253, %v1520
      %v1522 = vpop.f32.mrf.mxu0
      %v1523 = vpop.f32.mrf.mxu0
      %v1524 = vadd.f32 %v1258, %v1523
      %v1525 = vpop.f32.mrf.mxu0
      %1526 = vmatprep.mubr.bf16.mxu0 %v1436
      %1527 = vmatmul.mubr.bf16.gmra.mxu0 %v1332
      %v1528 = vpop.f32.mrf.mxu0
      %v1529 = vadd.f32 %v1263, %v1528
      %v1530 = vpop.f32.mrf.mxu0
      %v1531 = vpop.f32.mrf.mxu0
      %v1532 = vadd.f32 %v1268, %v1531
      %v1533 = vpop.f32.mrf.mxu0
      %1534 = vdwg.mxu0
      %v1535 = vmax.f32 %v1473, 0.0
      %v1536 = vmax.f32 %v1476, 0.0
      %v1537 = vmax.f32 %v1481, 0.0
      %v1538 = vmax.f32 %v1484, 0.0
      %v1539 = vmax.f32 %v1489, 0.0
      %v1540 = vmax.f32 %v1492, 0.0
      %v1541 = vmax.f32 %v1497, 0.0
      %v1542 = vmax.f32 %v1500, 0.0
      %v1543 = vmax.f32 %v1505, 0.0
      %v1544 = vmax.f32 %v1508, 0.0
      %v1545 = vmax.f32 %v1513, 0.0
      %v1546 = vmax.f32 %v1516, 0.0
      %v1547 = vmax.f32 %v1521, 0.0
      %v1548 = vmax.f32 %v1524, 0.0
      %v1549 = vmax.f32 %v1529, 0.0
      %v1550 = vmax.f32 %v1532, 0.0
      %v1551 = vld [vmem:[%s6] sm:$0xf]
      %v1552 = vld [vmem:[%s6 + $0x4] sm:$0x1]
      %v1553 = vpack.c.bf16 %v1536, %v1535
      %v1554 = vpack.c.bf16 %v1538, %v1537
      %v1555 = vpack.c.bf16 %v1540, %v1539
      %v1556 = vpack.c.bf16 %v1542, %v1541
      %v1557 = vpack.c.bf16 %v1544, %v1543
      %v1558 = vpack.c.bf16 %v1546, %v1545
      %v1559 = vpack.c.bf16 %v1548, %v1547
      %v1560 = vpack.c.bf16 %v1550, %v1549
      %v1563 = vunpack.c.l.b16 %v1551
      %v1564 = vunpack.c.l.b16 %v1552
      %v1565 = vpack.c.b16 %v1564, %v1563
      %1567 = vmatprep.subr.bf16.mxu0 0
      %1568 = vmatpush1.bf16.msra.mxu0 %v1560
      %1569 = vmatprep.subr.bf16.mxu0 0
      %1570 = vmatpush1.bf16.msra.mxu0 %v1559
      %1571 = vmatprep.subr.bf16.mxu0 0
      %1572 = vmatpush1.bf16.msra.mxu0 %v1558
      %1573 = vmatprep.subr.bf16.mxu0 0
      %1574 = vmatpush1.bf16.msra.mxu0 %v1557
      %1575 = vmatprep.subr.bf16.mxu0 0
      %1576 = vmatpush1.bf16.msra.mxu0 %v1556
      %1577 = vmatprep.subr.bf16.mxu0 0
      %1578 = vmatpush1.bf16.msra.mxu0 %v1555
      %1579 = vmatprep.subr.bf16.mxu0 0
      %1580 = vmatpush1.bf16.msra.mxu0 %v1554
      %1581 = vmatprep.subr.bf16.mxu0 0
      %1582 = vmatpush1.bf16.msra.mxu0 %v1553
      %1583 = vmatprep.subr.bf16.mxu0 0
      %1584 = vmatpush2.bf16.msra.mxu0 0
      %1585 = vmatprep.subr.bf16.mxu0 0
      %1586 = vmatpush2.bf16.msra.mxu0 0
      %1587 = vmatprep.subr.bf16.mxu0 0
      %1588 = vmatpush2.bf16.msra.mxu0 0
      %1589 = vmatprep.subr.bf16.mxu0 0
      %1590 = vmatpush2.bf16.msra.mxu0 0
      %1591 = vmatprep.subr.bf16.mxu0 0
      %1592 = vmatpush2.bf16.msra.mxu0 0
      %1593 = vmatprep.subr.bf16.mxu0 0
      %1594 = vmatpush2.bf16.msra.mxu0 0
      %1595 = vmatprep.subr.bf16.mxu0 0
      %1596 = vmatpush2.bf16.msra.mxu0 0
      %1597 = vmatprep.subr.bf16.mxu0 0
      %1598 = vmatpush2.bf16.msra.mxu0 0
      %1599 = vmatprep.mubr.bf16.mxu0 0
      %1600 = vmatmul.mubr.bf16.gmra.mxu0 %v1565
      %v1601 = vpop.f32.mrf.mxu0
      %v1602 = vadd.f32 0.0, %v1601
      %v1603 = vpop.f32.mrf.mxu0
      %v1604 = vpop.f32.mrf.mxu0
      %v1605 = vadd.f32 0.0, %v1604
      %v1606 = vpop.f32.mrf.mxu0
      %1607 = vdwg.mxu0
      %v1608 = vpack.c.bf16 %v1605, %v1602
      %v1609 = vld [vmem:[%s7] sm:$0xf]
      %v1610 = vld [vmem:[%s7 + $0x4] sm:$0xf]
      %v1611 = vld [vmem:[%s7 + $0x8] sm:$0xf]
      %v1612 = vld [vmem:[%s7 + $0xc] sm:$0xf]
      %v1613 = vld [vmem:[%s7 + $0x10] sm:$0xf]
      %v1614 = vld [vmem:[%s7 + $0x14] sm:$0xf]
      %v1615 = vld [vmem:[%s7 + $0x18] sm:$0xf]
      %v1616 = vld [vmem:[%s7 + $0x1c] sm:$0xf]
      %v1617 = vld [vmem:[%s7 + $0x20] sm:$0xf]
      %v1618 = vld [vmem:[%s7 + $0x24] sm:$0xf]
      %v1619 = vld [vmem:[%s7 + $0x28] sm:$0xf]
      %v1620 = vld [vmem:[%s7 + $0x2c] sm:$0xf]
      %v1621 = vld [vmem:[%s7 + $0x30] sm:$0xf]
      %v1622 = vld [vmem:[%s7 + $0x34] sm:$0xf]
      %v1623 = vld [vmem:[%s7 + $0x38] sm:$0xf]
      %v1624 = vld [vmem:[%s7 + $0x3c] sm:$0xf]
      %v1625 = vld [vmem:[%s8] sm:$0xff]
      %v1626 = vld [vmem:[%s8 + $0x8] sm:$0x3]
      %1628 = vset.pattern.permute.xlu0 0
      %1629 = vperm.xlu0 %1628, %v1625
      %v1630 = vpop.permute.xlu0 %1629
      %1633 = vset.pattern.permute.xlu0 0
      %1634 = vperm.xlu0 %1633, %v1626
      %v1635 = vpop.permute.xlu0 %1634
      %v1653 = vunpack.c.l.b16 %v1609
      %v1654 = vunpack.c.l.b16 %v1610
      %v1655 = vunpack.c.l.b16 %v1611
      %v1656 = vunpack.c.l.b16 %v1612
      %v1657 = vunpack.c.l.b16 %v1613
      %v1658 = vunpack.c.l.b16 %v1614
      %v1659 = vunpack.c.l.b16 %v1615
      %v1660 = vunpack.c.l.b16 %v1616
      %v1661 = vunpack.c.l.b16 %v1617
      %v1662 = vunpack.c.l.b16 %v1618
      %v1663 = vunpack.c.l.b16 %v1619
      %v1664 = vunpack.c.l.b16 %v1620
      %v1665 = vunpack.c.l.b16 %v1621
      %v1666 = vunpack.c.l.b16 %v1622
      %v1667 = vunpack.c.l.b16 %v1623
      %v1668 = vunpack.c.l.b16 %v1624
      %v1669 = vpack.c.b16 %v1654, %v1653
      %v1670 = vpack.c.b16 %v1656, %v1655
      %v1671 = vpack.c.b16 %v1658, %v1657
      %v1672 = vpack.c.b16 %v1660, %v1659
      %v1673 = vpack.c.b16 %v1662, %v1661
      %v1674 = vpack.c.b16 %v1664, %v1663
      %v1675 = vpack.c.b16 %v1666, %v1665
      %v1676 = vpack.c.b16 %v1668, %v1667
      %1685 = vmatprep.subr.bf16.mxu0 0
      %1686 = vmatpush1.bf16.msra.mxu0 %v1676
      %1687 = vmatprep.subr.bf16.mxu0 0
      %1688 = vmatpush1.bf16.msra.mxu0 %v1675
      %1689 = vmatprep.subr.bf16.mxu0 0
      %1690 = vmatpush1.bf16.msra.mxu0 %v1674
      %1691 = vmatprep.subr.bf16.mxu0 0
      %1692 = vmatpush1.bf16.msra.mxu0 %v1673
      %1693 = vmatprep.subr.bf16.mxu0 0
      %1694 = vmatpush1.bf16.msra.mxu0 %v1672
      %1695 = vmatprep.subr.bf16.mxu0 0
      %1696 = vmatpush1.bf16.msra.mxu0 %v1671
      %1697 = vmatprep.subr.bf16.mxu0 0
      %1698 = vmatpush1.bf16.msra.mxu0 %v1670
      %1699 = vmatprep.subr.bf16.mxu0 0
      %1700 = vmatpush1.bf16.msra.mxu0 %v1669
      %1701 = vmatprep.subr.bf16.mxu0 0
      %1702 = vmatpush2.bf16.msra.mxu0 0
      %1703 = vmatprep.subr.bf16.mxu0 0
      %1704 = vmatpush2.bf16.msra.mxu0 0
      %1705 = vmatprep.subr.bf16.mxu0 0
      %1706 = vmatpush2.bf16.msra.mxu0 0
      %1707 = vmatprep.subr.bf16.mxu0 0
      %1708 = vmatpush2.bf16.msra.mxu0 0
      %1709 = vmatprep.subr.bf16.mxu0 0
      %1710 = vmatpush2.bf16.msra.mxu0 0
      %1711 = vmatprep.subr.bf16.mxu0 0
      %1712 = vmatpush2.bf16.msra.mxu0 0
      %1713 = vmatprep.subr.bf16.mxu0 0
      %1714 = vmatpush2.bf16.msra.mxu0 0
      %1715 = vmatprep.subr.bf16.mxu0 0
      %1716 = vmatpush2.bf16.msra.mxu0 0
      %1717 = vmatprep.mubr.bf16.mxu0 0
      %1718 = vmatmul.mubr.bf16.gmra.mxu0 %v1608
      %v1719 = vpop.f32.mrf.mxu0
      %v1720 = vadd.f32 %v1630, %v1719
      %v1721 = vpop.f32.mrf.mxu0
      %v1722 = vpop.f32.mrf.mxu0
      %v1723 = vadd.f32 %v1635, %v1722
      %v1724 = vpop.f32.mrf.mxu0
      %1725 = vdwg.mxu0
      %vm1726 = vcmask 64512
      %1727 = vst.msk [vmem:[%s332] sm:$0xff] %vm1726, %v1720
      %vm1728 = vcmask 58368
      %1729 = vst.msk [vmem:[%s332 + $0x8] sm:$0x3] %vm1728, %v1723
      %p1730 = scmp.lt.s32.totalorder %s20, 1
      %s1731 = scalar_select %p1730, %s20, 1
      %s1732 = smul.addr %s1731, 2
      %s1733 = smul.addr %s1732, 8
      %s1734 = scalar_lea.vmem %s9, %s1733
      // Predicated region
      $region57: #{model_wrapper_forward.1} parent=55 // pred_check
        %p1735 = pneg %p232
      $region58: #{model_wrapper_forward.1} parent=55 // pred_check_branch
        %1737 = sbr.rel (%p1735) target = $region60
      $region59: #{model_wrapper_forward.1} parent=55 // pred_region
        _
      $region60: #{model_wrapper_forward.1} parent=55 // pred_fallthru
        _
    $region56: #{model_wrapper_forward.1} parent=5 // pred_fallthru
      _
    %p1738 = scmp.le.s32.totalorder 2, %s15
    // Predicated region
    $region61: #{model_wrapper_forward.1} parent=5 // pred_check
      %p1739 = pneg %p1738
    $region62: #{model_wrapper_forward.1} parent=5 // pred_check_branch
      %1741 = sbr.rel (%p1739) target = $region64
    $region63: #{model_wrapper_forward.1} parent=5 // pred_region
      %s1742 = ssub.s32 %s15, 2
      // Predicated region
      $region65: #{model_wrapper_forward.1} parent=63 // pred_check
        %p1743 = pneg %p238
      $region66: #{model_wrapper_forward.1} parent=63 // pred_check_branch
        %1745 = sbr.rel (%p1743) target = $region68
      $region67: #{model_wrapper_forward.1} parent=63 // pred_region
        %p1746 = scmp.lt.s32.totalorder %s21, 1
        %s1747 = scalar_select %p1746, %s21, 1
        %s1748 = smul.addr %s1747, 2
        %s1749 = smul.addr %s1748, 8
        %s1750 = scalar_lea.vmem %s9, %s1749
      $region68: #{model_wrapper_forward.1} parent=63 // pred_fallthru
        _
    $region64: #{model_wrapper_forward.1} parent=5 // pred_fallthru
      _
  $region6: #{model_wrapper_forward.1} parent=0 // loop_footer
    %s19 = sadd.s32 1, %s15
  $region7: #{model_wrapper_forward.1} parent=0 // loop_footer_branch
    %14 = sbr.rel target = $region3
  $region8: #{model_wrapper_forward.1} parent=0 // loop_exit
    _

</llo_original>
